<compile_context>
chip_gen: v6e
topology: v6e:2x2x1
jax: 0.10.0
libtpu: 0.0.40
codegen_flags: <defaults>
</compile_context>

<pallas_src>
import jax
import jax.numpy as jnp
from jax.experimental import pallas as pl
from jax.experimental.pallas import tpu as pltpu


# ----------------------------------------------------------------------------
# Fused Pallas kernel: both TCN_GCN_units of the multiscale block, one grid step
# per batch element, lane-dense [T, V*C] activations.
# ----------------------------------------------------------------------------
def _make_fused_kernel(T, W1, W2, Kt1, Kt2, has_down1, has_down2):
    pad1 = (Kt1 - 1) // 2
    pad2 = (Kt2 - 1) // 2

    def temporal(y, Wtt, bias_t, Kt, pad, W):
        # im2col over the temporal axis: ycol[t, dt*W + j] = ypad[t + dt, j]
        zp = jnp.zeros((pad, W), jnp.float32)
        ypad = jnp.concatenate([zp, y, zp], axis=0)                  # [T + 2*pad, W]
        ycol = jnp.concatenate([ypad[dt:dt + T] for dt in range(Kt)], axis=1)  # [T, Kt*W]
        z = jnp.dot(ycol, Wtt, preferred_element_type=jnp.float32) + bias_t
        return jnp.maximum(z, 0.0)

    def kernel(x_ref, Bc_ref, bgc_ref, Wtt1_ref, bt1_ref, Wtt2_ref, bt2_ref, *rest):
        idx = 0
        if has_down1:
            Wd1_ref, bd1_ref = rest[idx], rest[idx + 1]
            idx += 2
        if has_down2:
            Wd2_ref, bd2_ref = rest[idx], rest[idx + 1]
            idx += 2
        o1_ref, o2_ref = rest[idx], rest[idx + 1]

        x2 = x_ref[0].astype(jnp.float32)                            # [T, V*Cin]

        # ---- unit_gcn for BOTH units in one matmul (BN folded into Bc/bgc) ----
        y_both = jnp.dot(x2, Bc_ref[...], preferred_element_type=jnp.float32) + bgc_ref[...]
        y_both = jnp.maximum(y_both, 0.0)                            # [T, W1 + W2]
        y1 = y_both[:, :W1]
        y2 = y_both[:, W1:]

        # ---- Unit2D temporal conv (im2col, single matmul each, BN folded) ----
        z1 = temporal(y1, Wtt1_ref[...], bt1_ref[...], Kt1, pad1, W1)
        z2 = temporal(y2, Wtt2_ref[...], bt2_ref[...], Kt2, pad2, W2)

        # ---- residual / down1 branch ----
        if has_down1:
            d1 = jnp.maximum(
                jnp.dot(x2, Wd1_ref[...], preferred_element_type=jnp.float32) + bd1_ref[...],
                0.0)
        else:
            d1 = x2  # identity skip (Cin == Cout, stride == 1; asserted in wrapper)
        if has_down2:
            d2 = jnp.maximum(
                jnp.dot(x2, Wd2_ref[...], preferred_element_type=jnp.float32) + bd2_ref[...],
                0.0)
        else:
            d2 = x2

        o1_ref[0] = (z1 + d1).astype(o1_ref.dtype)
        o2_ref[0] = (z2 + d2).astype(o2_ref.dtype)

    return kernel


def _full_spec(arr):
    nd = arr.ndim
    return pl.BlockSpec(arr.shape, lambda n, _nd=nd: (0,) * _nd)


# ----------------------------------------------------------------------------
# Wrapper-side algebraic fusion: Kronecker GCN weight, block-diag temporal
# weight, BN folding, lane-tiled biases.
# ----------------------------------------------------------------------------
def _prep_unit(p, V, Cin):
    A = p['A'].astype(jnp.float32)                 # [K, V, V]
    Wg = p['Wg'].astype(jnp.float32)               # [K, Cin, Cout]
    Cout = Wg.shape[-1]
    gs = p['gs'].reshape(Cout)
    gb = p['gb'].reshape(Cout)
    bg = p['bg'].reshape(Cout)

    # B[w*Cin+c, v*Cout+o] = sum_k A_k[w, v] * Wg_k[c, o]   (BN scale folded in)
    B = jnp.einsum('kwv,kco->wcvo', A, Wg).reshape(V * Cin, V * Cout)
    B = B * jnp.tile(gs, V)[None, :]
    bias_g = jnp.tile(bg * gs + gb, V)[None, :]    # [1, V*Cout]

    Wt = p['Wt'].astype(jnp.float32)               # [Kt, Cout, Cout]
    Kt = Wt.shape[0]
    ts = p['ts'].reshape(Cout)
    tb = p['tb'].reshape(Cout)
    bt = p['bt'].reshape(Cout)
    I = jnp.eye(V, dtype=jnp.float32)
    # block-diagonal over V: Wtt[dt*V*Cout + v*Cout + c, w*Cout + o] = Wt[dt,c,o] * (v==w)
    Wtt = jnp.einsum('dco,vw->dvcwo', Wt, I).reshape(Kt * V * Cout, V * Cout)
    Wtt = Wtt * jnp.tile(ts, V)[None, :]
    bias_t = jnp.tile(bt * ts + tb, V)[None, :]    # [1, V*Cout]

    out = dict(B=B, bias_g=bias_g, Wtt=Wtt, bias_t=bias_t, Kt=Kt, Cout=Cout)
    if 'Wd' in p:
        Wd = p['Wd'].astype(jnp.float32)           # [Cin, Cout]
        ds = p['ds'].reshape(Cout)
        db = p['db'].reshape(Cout)
        bd = p['bd'].reshape(Cout)
        Wdd = jnp.einsum('co,vw->vcwo', Wd, I).reshape(V * Cin, V * Cout)
        Wdd = Wdd * jnp.tile(ds, V)[None, :]
        bias_d = jnp.tile(bd * ds + db, V)[None, :]
        out['Wdd'] = Wdd
        out['bias_d'] = bias_d
    return out


def tcn_gcn_unit_multiscale(x_nchw, p1, p2):
    """x_nchw: [N, C, T, V] (PyTorch NCHW). Returns [N, Cout1+Cout2, T, V]."""
    N, Cin, T, V = x_nchw.shape
    x_tvc = jnp.transpose(x_nchw, (0, 2, 3, 1)).reshape(N, T, V * Cin)

    u1 = _prep_unit(p1, V, Cin)
    u2 = _prep_unit(p2, V, Cin)
    C1, C2 = u1['Cout'], u2['Cout']
    W1, W2 = V * C1, V * C2
    has_down1 = 'Wdd' in u1
    has_down2 = 'Wdd' in u2
    if not has_down1:
        assert Cin == C1, "identity skip requires Cin == Cout (and stride == 1)"
    if not has_down2:
        assert Cin == C2, "identity skip requires Cin == Cout (and stride == 1)"

    # Shared GCN matmul for both units: concat along output lanes.
    B_cat = jnp.concatenate([u1['B'], u2['B']], axis=1)              # [V*Cin, W1+W2]
    bias_g_cat = jnp.concatenate([u1['bias_g'], u2['bias_g']], axis=1)

    args = [x_tvc, B_cat, bias_g_cat, u1['Wtt'], u1['bias_t'], u2['Wtt'], u2['bias_t']]
    in_specs = [pl.BlockSpec((1, T, V * Cin), lambda n: (n, 0, 0))] + \
               [_full_spec(a) for a in args[1:]]
    if has_down1:
        args += [u1['Wdd'], u1['bias_d']]
        in_specs += [_full_spec(u1['Wdd']), _full_spec(u1['bias_d'])]
    if has_down2:
        args += [u2['Wdd'], u2['bias_d']]
        in_specs += [_full_spec(u2['Wdd']), _full_spec(u2['bias_d'])]

    kernel = _make_fused_kernel(T, W1, W2, u1['Kt'], u2['Kt'], has_down1, has_down2)

    o1, o2 = pl.pallas_call(
        kernel,
        out_shape=(jax.ShapeDtypeStruct((N, T, W1), x_nchw.dtype),
                   jax.ShapeDtypeStruct((N, T, W2), x_nchw.dtype)),
        grid_spec=pltpu.PrefetchScalarGridSpec(
            num_scalar_prefetch=0,
            grid=(N,),
            in_specs=in_specs,
            out_specs=[pl.BlockSpec((1, T, W1), lambda n: (n, 0, 0)),
                       pl.BlockSpec((1, T, W2), lambda n: (n, 0, 0))],
        ),
        compiler_params=pltpu.CompilerParams(dimension_semantics=("parallel",)),
    )(*args)

    o1 = o1.reshape(N, T, V, C1)
    o2 = o2.reshape(N, T, V, C2)
    out = jnp.concatenate([o1, o2], axis=-1)       # == torch.cat(dim=1) in NCHW
    return jnp.transpose(out, (0, 3, 1, 2))        # -> [N, C1+C2, T, V]


# ----------------------------------------------------------------------------
# Deterministic parameter construction (eval-mode BN folded to scale/shift)
# ----------------------------------------------------------------------------
def make_adjacency(key, K_adj, V):
    mats = [jnp.eye(V, dtype=jnp.float32)]
    for k in jax.random.split(key, K_adj - 1):
        m = (jax.random.uniform(k, (V, V)) > 0.7).astype(jnp.float32)
        m = m + m.T
        m = m / jnp.maximum(m.sum(axis=0, keepdims=True), 1.0)
        mats.append(m)
    return jnp.stack(mats)


def _bn_params(key, C):
    k1, k2, k3, k4 = jax.random.split(key, 4)
    gamma = jax.random.uniform(k1, (C,), minval=0.5, maxval=1.5)
    beta = 0.1 * jax.random.normal(k2, (C,))
    mean = 0.1 * jax.random.normal(k3, (C,))
    var = jax.random.uniform(k4, (C,), minval=0.5, maxval=1.5)
    scale = gamma / jnp.sqrt(var + 1e-5)
    shift = beta - mean * scale
    return (scale.reshape(1, 1, C).astype(jnp.float32),
            shift.reshape(1, 1, C).astype(jnp.float32))


def init_unit_params(key, Cin, Cout, A, Kt, stride=1):
    K_adj = A.shape[0]
    ks = jax.random.split(key, 9)
    p = {'A': A}
    # unit_gcn: one 1x1 conv per adjacency matrix; W as [k, Cin, Cout],
    # biases summed into a single vector (sum_k conv_k adds sum_k b_k).
    p['Wg'] = 0.2 * jax.random.normal(ks[0], (K_adj, Cin, Cout), jnp.float32)
    p['bg'] = (0.1 * jax.random.normal(ks[1], (Cout,), jnp.float32)).reshape(1, 1, Cout)
    p['gs'], p['gb'] = _bn_params(ks[2], Cout)
    # Unit2D tcn: Conv2d weight [Cout, Cout, Kt, 1] stored as [Kt, Cout_in, Cout]
    p['Wt'] = 0.15 * jax.random.normal(ks[3], (Kt, Cout, Cout), jnp.float32)
    p['bt'] = (0.1 * jax.random.normal(ks[4], (Cout,), jnp.float32)).reshape(1, 1, Cout)
    p['ts'], p['tb'] = _bn_params(ks[5], Cout)
    if Cin != Cout or stride != 1:  # down1 = Unit2D(in, out, kernel_size=1)
        p['Wd'] = 0.2 * jax.random.normal(ks[6], (Cin, Cout), jnp.float32)
        p['bd'] = (0.1 * jax.random.normal(ks[7], (Cout,), jnp.float32)).reshape(1, 1, Cout)
        p['ds'], p['db'] = _bn_params(ks[8], Cout)
    return p


# ----------------------------------------------------------------------------
# Pure-JAX reference (NCHW, mirrors the PyTorch forward) for verification
# ----------------------------------------------------------------------------
def _unit_ref_nchw(x, p):
    N, C, T, V = x.shape
    K_adj = p['A'].shape[0]
    Kt = p['Wt'].shape[0]
    Cout = p['Wg'].shape[-1]
    pad = (Kt - 1) // 2
    c = lambda v: v.reshape(-1)[None, :, None, None]

    y = jnp.zeros((N, Cout, T, V), jnp.float32)
    for k in range(K_adj):
        xa = jnp.einsum('nctw,wv->nctv', x, p['A'][k])
        y = y + jnp.einsum('nctv,co->notv', xa, p['Wg'][k])
    y = (y + c(p['bg'])) * c(p['gs']) + c(p['gb'])
    y = jnp.maximum(y, 0.0)

    ypad = jnp.pad(y, ((0, 0), (0, 0), (pad, pad), (0, 0)))
    z = jnp.zeros_like(y)
    for dt in range(Kt):
        z = z + jnp.einsum('nctv,co->notv', ypad[:, :, dt:dt + T, :], p['Wt'][dt])
    z = (z + c(p['bt'])) * c(p['ts']) + c(p['tb'])
    z = jnp.maximum(z, 0.0)

    if 'Wd' in p:
        d = jnp.einsum('nctv,co->notv', x, p['Wd'])
        d = (d + c(p['bd'])) * c(p['ds']) + c(p['db'])
        d = jnp.maximum(d, 0.0)
    else:
        d = x
    return z + d


def multiscale_ref(x, p1, p2):
    return jnp.concatenate([_unit_ref_nchw(x, p1), _unit_ref_nchw(x, p2)], axis=1)


# ----------------------------------------------------------------------------
if __name__ == "__main__":
    key = jax.random.PRNGKey(0)
    N, Cin, T, V = 2, 4, 16, 16          # NCHW: [batch, channels, time, joints]
    out_channels = 16                    # per-unit Cout = out_channels // 2 = 8
    Cout_half = out_channels // 2
    K_adj = 3
    kernel_size = 9                      # unit_1: 9, unit_2: 2*9 - 1 = 17

    k_x, k_A, k_u1, k_u2 = jax.random.split(key, 4)
    x = jax.random.normal(k_x, (N, Cin, T, V), jnp.float32)
    A = make_adjacency(k_A, K_adj, V)

    p1 = init_unit_params(k_u1, Cin, Cout_half, A, Kt=kernel_size)
    p2 = init_unit_params(k_u2, Cin, Cout_half, A, Kt=2 * kernel_size - 1)

    out = tcn_gcn_unit_multiscale(x, p1, p2)
    out = jax.block_until_ready(out)

    assert out.shape == (N, out_channels, T, V), out.shape

    ref = multiscale_ref(x, p1, p2)
    max_err = float(jnp.max(jnp.abs(out - ref)))
    assert max_err < 2e-2, f"mismatch vs reference: max_err={max_err}"

    print("KERNEL_OK")
</pallas_src>

<mosaic_0001>
module attributes {stable_mosaic.version = 11 : i64} {
  func.func @kernel(%arg0: i32, %arg1: memref<1x16x64xf32, #tpu.memory_space<vmem>>, %arg2: memref<64x256xf32, #tpu.memory_space<vmem>>, %arg3: memref<1x256xf32, #tpu.memory_space<vmem>>, %arg4: memref<1152x128xf32, #tpu.memory_space<vmem>>, %arg5: memref<1x128xf32, #tpu.memory_space<vmem>>, %arg6: memref<2176x128xf32, #tpu.memory_space<vmem>>, %arg7: memref<1x128xf32, #tpu.memory_space<vmem>>, %arg8: memref<64x128xf32, #tpu.memory_space<vmem>>, %arg9: memref<1x128xf32, #tpu.memory_space<vmem>>, %arg10: memref<64x128xf32, #tpu.memory_space<vmem>>, %arg11: memref<1x128xf32, #tpu.memory_space<vmem>>, %arg12: memref<1x16x128xf32, #tpu.memory_space<vmem>>, %arg13: memref<1x16x128xf32, #tpu.memory_space<vmem>>) attributes {dimension_semantics = [#tpu.dimension_semantics<parallel>], iteration_bounds = array<i64: 2>, scalar_prefetch = 0 : i64, scratch_operands = 0 : i64, tpu.core_type = #tpu.core_type<tc>, window_params = [{transform_indices = @transform_0, window_bounds = array<i64: 1, 16, 64>}, {pipeline_mode = #tpu.pipeline_mode<synchronous>, transform_indices = @transform_1, window_bounds = array<i64: 64, 256>}, {pipeline_mode = #tpu.pipeline_mode<synchronous>, transform_indices = @transform_2, window_bounds = array<i64: 1, 256>}, {pipeline_mode = #tpu.pipeline_mode<synchronous>, transform_indices = @transform_3, window_bounds = array<i64: 1152, 128>}, {pipeline_mode = #tpu.pipeline_mode<synchronous>, transform_indices = @transform_4, window_bounds = array<i64: 1, 128>}, {pipeline_mode = #tpu.pipeline_mode<synchronous>, transform_indices = @transform_5, window_bounds = array<i64: 2176, 128>}, {pipeline_mode = #tpu.pipeline_mode<synchronous>, transform_indices = @transform_6, window_bounds = array<i64: 1, 128>}, {pipeline_mode = #tpu.pipeline_mode<synchronous>, transform_indices = @transform_7, window_bounds = array<i64: 64, 128>}, {pipeline_mode = #tpu.pipeline_mode<synchronous>, transform_indices = @transform_8, window_bounds = array<i64: 1, 128>}, {pipeline_mode = #tpu.pipeline_mode<synchronous>, transform_indices = @transform_9, window_bounds = array<i64: 64, 128>}, {pipeline_mode = #tpu.pipeline_mode<synchronous>, transform_indices = @transform_10, window_bounds = array<i64: 1, 128>}, {transform_indices = @transform_11, window_bounds = array<i64: 1, 16, 128>}, {transform_indices = @transform_12, window_bounds = array<i64: 1, 16, 128>}]} {
    %c0 = arith.constant 0 : index
    %c0_0 = arith.constant 0 : index
    %c0_1 = arith.constant 0 : index
    %0 = vector.load %arg1[%c0, %c0_0, %c0_1] : memref<1x16x64xf32, #tpu.memory_space<vmem>>, vector<1x16x64xf32>
    %1 = vector.shape_cast %0 : vector<1x16x64xf32> to vector<16x64xf32>
    %c0_2 = arith.constant 0 : index
    %c0_3 = arith.constant 0 : index
    %2 = vector.load %arg2[%c0_2, %c0_3] : memref<64x256xf32, #tpu.memory_space<vmem>>, vector<64x256xf32>
    %cst = arith.constant dense<0.000000e+00> : vector<16x256xf32>
    %3 = tpu.matmul %1, %2, %cst {dimension_numbers = #tpu.dot_dimension_numbers<[1], [0], [0], [1], [0, 0, 1, 1], [], []>} : vector<16x64xf32>, vector<64x256xf32>, vector<16x256xf32> -> vector<16x256xf32>
    %c0_4 = arith.constant 0 : index
    %c0_5 = arith.constant 0 : index
    %4 = vector.load %arg3[%c0_4, %c0_5] : memref<1x256xf32, #tpu.memory_space<vmem>>, vector<1x256xf32>
    %5 = vector.broadcast %4 : vector<1x256xf32> to vector<16x256xf32>
    %6 = arith.addf %3, %5 : vector<16x256xf32>
    %cst_6 = arith.constant 0.000000e+00 : f32
    %7 = vector.broadcast %cst_6 : f32 to vector<16x256xf32>
    %8 = arith.maximumf %6, %7 : vector<16x256xf32>
    %9 = vector.extract_strided_slice %8 {offsets = [0, 0], sizes = [16, 128], strides = [1, 1]} : vector<16x256xf32> to vector<16x128xf32>
    %10 = vector.extract_strided_slice %8 {offsets = [0, 128], sizes = [16, 128], strides = [1, 1]} : vector<16x256xf32> to vector<16x128xf32>
    %c0_7 = arith.constant 0 : index
    %c0_8 = arith.constant 0 : index
    %11 = vector.load %arg4[%c0_7, %c0_8] : memref<1152x128xf32, #tpu.memory_space<vmem>>, vector<1152x128xf32>
    %c0_9 = arith.constant 0 : index
    %c0_10 = arith.constant 0 : index
    %12 = vector.load %arg5[%c0_9, %c0_10] : memref<1x128xf32, #tpu.memory_space<vmem>>, vector<1x128xf32>
    %cst_11 = arith.constant 0.000000e+00 : f32
    %13 = vector.broadcast %cst_11 : f32 to vector<4x128xf32>
    %14 = tpu.concatenate %13, %9, %13 in 0 : vector<4x128xf32>, vector<16x128xf32>, vector<4x128xf32> -> vector<24x128xf32>
    %15 = vector.extract_strided_slice %14 {offsets = [0, 0], sizes = [16, 128], strides = [1, 1]} : vector<24x128xf32> to vector<16x128xf32>
    %16 = vector.extract_strided_slice %14 {offsets = [1, 0], sizes = [16, 128], strides = [1, 1]} : vector<24x128xf32> to vector<16x128xf32>
    %17 = vector.extract_strided_slice %14 {offsets = [2, 0], sizes = [16, 128], strides = [1, 1]} : vector<24x128xf32> to vector<16x128xf32>
    %18 = vector.extract_strided_slice %14 {offsets = [3, 0], sizes = [16, 128], strides = [1, 1]} : vector<24x128xf32> to vector<16x128xf32>
    %19 = vector.extract_strided_slice %14 {offsets = [4, 0], sizes = [16, 128], strides = [1, 1]} : vector<24x128xf32> to vector<16x128xf32>
    %20 = vector.extract_strided_slice %14 {offsets = [5, 0], sizes = [16, 128], strides = [1, 1]} : vector<24x128xf32> to vector<16x128xf32>
    %21 = vector.extract_strided_slice %14 {offsets = [6, 0], sizes = [16, 128], strides = [1, 1]} : vector<24x128xf32> to vector<16x128xf32>
    %22 = vector.extract_strided_slice %14 {offsets = [7, 0], sizes = [16, 128], strides = [1, 1]} : vector<24x128xf32> to vector<16x128xf32>
    %23 = vector.extract_strided_slice %14 {offsets = [8, 0], sizes = [16, 128], strides = [1, 1]} : vector<24x128xf32> to vector<16x128xf32>
    %24 = tpu.concatenate %15, %16, %17, %18, %19, %20, %21, %22, %23 in 1 : vector<16x128xf32>, vector<16x128xf32>, vector<16x128xf32>, vector<16x128xf32>, vector<16x128xf32>, vector<16x128xf32>, vector<16x128xf32>, vector<16x128xf32>, vector<16x128xf32> -> vector<16x1152xf32>
    %cst_12 = arith.constant dense<0.000000e+00> : vector<16x128xf32>
    %25 = tpu.matmul %24, %11, %cst_12 {dimension_numbers = #tpu.dot_dimension_numbers<[1], [0], [0], [1], [0, 0, 1, 1], [], []>} : vector<16x1152xf32>, vector<1152x128xf32>, vector<16x128xf32> -> vector<16x128xf32>
    %26 = vector.broadcast %12 : vector<1x128xf32> to vector<16x128xf32>
    %27 = arith.addf %25, %26 : vector<16x128xf32>
    %cst_13 = arith.constant 0.000000e+00 : f32
    %28 = vector.broadcast %cst_13 : f32 to vector<16x128xf32>
    %29 = arith.maximumf %27, %28 : vector<16x128xf32>
    %c0_14 = arith.constant 0 : index
    %c0_15 = arith.constant 0 : index
    %30 = vector.load %arg6[%c0_14, %c0_15] : memref<2176x128xf32, #tpu.memory_space<vmem>>, vector<2176x128xf32>
    %c0_16 = arith.constant 0 : index
    %c0_17 = arith.constant 0 : index
    %31 = vector.load %arg7[%c0_16, %c0_17] : memref<1x128xf32, #tpu.memory_space<vmem>>, vector<1x128xf32>
    %cst_18 = arith.constant 0.000000e+00 : f32
    %32 = vector.broadcast %cst_18 : f32 to vector<8x128xf32>
    %33 = tpu.concatenate %32, %10, %32 in 0 : vector<8x128xf32>, vector<16x128xf32>, vector<8x128xf32> -> vector<32x128xf32>
    %34 = vector.extract_strided_slice %33 {offsets = [0, 0], sizes = [16, 128], strides = [1, 1]} : vector<32x128xf32> to vector<16x128xf32>
    %35 = vector.extract_strided_slice %33 {offsets = [1, 0], sizes = [16, 128], strides = [1, 1]} : vector<32x128xf32> to vector<16x128xf32>
    %36 = vector.extract_strided_slice %33 {offsets = [2, 0], sizes = [16, 128], strides = [1, 1]} : vector<32x128xf32> to vector<16x128xf32>
    %37 = vector.extract_strided_slice %33 {offsets = [3, 0], sizes = [16, 128], strides = [1, 1]} : vector<32x128xf32> to vector<16x128xf32>
    %38 = vector.extract_strided_slice %33 {offsets = [4, 0], sizes = [16, 128], strides = [1, 1]} : vector<32x128xf32> to vector<16x128xf32>
    %39 = vector.extract_strided_slice %33 {offsets = [5, 0], sizes = [16, 128], strides = [1, 1]} : vector<32x128xf32> to vector<16x128xf32>
    %40 = vector.extract_strided_slice %33 {offsets = [6, 0], sizes = [16, 128], strides = [1, 1]} : vector<32x128xf32> to vector<16x128xf32>
    %41 = vector.extract_strided_slice %33 {offsets = [7, 0], sizes = [16, 128], strides = [1, 1]} : vector<32x128xf32> to vector<16x128xf32>
    %42 = vector.extract_strided_slice %33 {offsets = [8, 0], sizes = [16, 128], strides = [1, 1]} : vector<32x128xf32> to vector<16x128xf32>
    %43 = vector.extract_strided_slice %33 {offsets = [9, 0], sizes = [16, 128], strides = [1, 1]} : vector<32x128xf32> to vector<16x128xf32>
    %44 = vector.extract_strided_slice %33 {offsets = [10, 0], sizes = [16, 128], strides = [1, 1]} : vector<32x128xf32> to vector<16x128xf32>
    %45 = vector.extract_strided_slice %33 {offsets = [11, 0], sizes = [16, 128], strides = [1, 1]} : vector<32x128xf32> to vector<16x128xf32>
    %46 = vector.extract_strided_slice %33 {offsets = [12, 0], sizes = [16, 128], strides = [1, 1]} : vector<32x128xf32> to vector<16x128xf32>
    %47 = vector.extract_strided_slice %33 {offsets = [13, 0], sizes = [16, 128], strides = [1, 1]} : vector<32x128xf32> to vector<16x128xf32>
    %48 = vector.extract_strided_slice %33 {offsets = [14, 0], sizes = [16, 128], strides = [1, 1]} : vector<32x128xf32> to vector<16x128xf32>
    %49 = vector.extract_strided_slice %33 {offsets = [15, 0], sizes = [16, 128], strides = [1, 1]} : vector<32x128xf32> to vector<16x128xf32>
    %50 = vector.extract_strided_slice %33 {offsets = [16, 0], sizes = [16, 128], strides = [1, 1]} : vector<32x128xf32> to vector<16x128xf32>
    %51 = tpu.concatenate %34, %35, %36, %37, %38, %39, %40, %41, %42, %43, %44, %45, %46, %47, %48, %49 in 1 : vector<16x128xf32>, vector<16x128xf32>, vector<16x128xf32>, vector<16x128xf32>, vector<16x128xf32>, vector<16x128xf32>, vector<16x128xf32>, vector<16x128xf32>, vector<16x128xf32>, vector<16x128xf32>, vector<16x128xf32>, vector<16x128xf32>, vector<16x128xf32>, vector<16x128xf32>, vector<16x128xf32>, vector<16x128xf32> -> vector<16x2048xf32>
    %52 = tpu.concatenate %51, %50 in 1 : vector<16x2048xf32>, vector<16x128xf32> -> vector<16x2176xf32>
    %cst_19 = arith.constant dense<0.000000e+00> : vector<16x128xf32>
    %53 = tpu.matmul %52, %30, %cst_19 {dimension_numbers = #tpu.dot_dimension_numbers<[1], [0], [0], [1], [0, 0, 1, 1], [], []>} : vector<16x2176xf32>, vector<2176x128xf32>, vector<16x128xf32> -> vector<16x128xf32>
    %54 = vector.broadcast %31 : vector<1x128xf32> to vector<16x128xf32>
    %55 = arith.addf %53, %54 : vector<16x128xf32>
    %cst_20 = arith.constant 0.000000e+00 : f32
    %56 = vector.broadcast %cst_20 : f32 to vector<16x128xf32>
    %57 = arith.maximumf %55, %56 : vector<16x128xf32>
    %c0_21 = arith.constant 0 : index
    %c0_22 = arith.constant 0 : index
    %58 = vector.load %arg8[%c0_21, %c0_22] : memref<64x128xf32, #tpu.memory_space<vmem>>, vector<64x128xf32>
    %cst_23 = arith.constant dense<0.000000e+00> : vector<16x128xf32>
    %59 = tpu.matmul %1, %58, %cst_23 {dimension_numbers = #tpu.dot_dimension_numbers<[1], [0], [0], [1], [0, 0, 1, 1], [], []>} : vector<16x64xf32>, vector<64x128xf32>, vector<16x128xf32> -> vector<16x128xf32>
    %c0_24 = arith.constant 0 : index
    %c0_25 = arith.constant 0 : index
    %60 = vector.load %arg9[%c0_24, %c0_25] : memref<1x128xf32, #tpu.memory_space<vmem>>, vector<1x128xf32>
    %61 = vector.broadcast %60 : vector<1x128xf32> to vector<16x128xf32>
    %62 = arith.addf %59, %61 : vector<16x128xf32>
    %cst_26 = arith.constant 0.000000e+00 : f32
    %63 = vector.broadcast %cst_26 : f32 to vector<16x128xf32>
    %64 = arith.maximumf %62, %63 : vector<16x128xf32>
    %c0_27 = arith.constant 0 : index
    %c0_28 = arith.constant 0 : index
    %65 = vector.load %arg10[%c0_27, %c0_28] : memref<64x128xf32, #tpu.memory_space<vmem>>, vector<64x128xf32>
    %cst_29 = arith.constant dense<0.000000e+00> : vector<16x128xf32>
    %66 = tpu.matmul %1, %65, %cst_29 {dimension_numbers = #tpu.dot_dimension_numbers<[1], [0], [0], [1], [0, 0, 1, 1], [], []>} : vector<16x64xf32>, vector<64x128xf32>, vector<16x128xf32> -> vector<16x128xf32>
    %c0_30 = arith.constant 0 : index
    %c0_31 = arith.constant 0 : index
    %67 = vector.load %arg11[%c0_30, %c0_31] : memref<1x128xf32, #tpu.memory_space<vmem>>, vector<1x128xf32>
    %68 = vector.broadcast %67 : vector<1x128xf32> to vector<16x128xf32>
    %69 = arith.addf %66, %68 : vector<16x128xf32>
    %cst_32 = arith.constant 0.000000e+00 : f32
    %70 = vector.broadcast %cst_32 : f32 to vector<16x128xf32>
    %71 = arith.maximumf %69, %70 : vector<16x128xf32>
    %72 = arith.addf %29, %64 : vector<16x128xf32>
    %c0_33 = arith.constant 0 : index
    %c0_34 = arith.constant 0 : index
    %c0_35 = arith.constant 0 : index
    %73 = vector.load %arg12[%c0_33, %c0_34, %c0_35] : memref<1x16x128xf32, #tpu.memory_space<vmem>>, vector<1x16x128xf32>
    %74 = vector.shape_cast %73 : vector<1x16x128xf32> to vector<16x128xf32>
    %75 = vector.shape_cast %72 : vector<16x128xf32> to vector<1x16x128xf32>
    tpu.vector_store %arg12[%c0_33, %c0_34, %c0_35], %75 {strides = array<i32>} : memref<1x16x128xf32, #tpu.memory_space<vmem>>, vector<1x16x128xf32>,
    %76 = arith.addf %57, %71 : vector<16x128xf32>
    %c0_36 = arith.constant 0 : index
    %c0_37 = arith.constant 0 : index
    %c0_38 = arith.constant 0 : index
    %77 = vector.load %arg13[%c0_36, %c0_37, %c0_38] : memref<1x16x128xf32, #tpu.memory_space<vmem>>, vector<1x16x128xf32>
    %78 = vector.shape_cast %77 : vector<1x16x128xf32> to vector<16x128xf32>
    %79 = vector.shape_cast %76 : vector<16x128xf32> to vector<1x16x128xf32>
    tpu.vector_store %arg13[%c0_36, %c0_37, %c0_38], %79 {strides = array<i32>} : memref<1x16x128xf32, #tpu.memory_space<vmem>>, vector<1x16x128xf32>,
    return
  }
  func.func @transform_0(%arg0: i32) -> (i32, i32, i32) {
    %c0_i32 = arith.constant 0 : i32
    %c0_i32_0 = arith.constant 0 : i32
    %c0_i32_1 = arith.constant 0 : i32
    return %arg0, %c0_i32, %c0_i32_0 : i32, i32, i32
  }
  func.func @transform_1(%arg0: i32) -> (i32, i32) {
    %c0_i32 = arith.constant 0 : i32
    %c0_i32_0 = arith.constant 0 : i32
    %c0_i32_1 = arith.constant 0 : i32
    return %c0_i32, %c0_i32_0 : i32, i32
  }
  func.func @transform_2(%arg0: i32) -> (i32, i32) {
    %c0_i32 = arith.constant 0 : i32
    %c0_i32_0 = arith.constant 0 : i32
    %c0_i32_1 = arith.constant 0 : i32
    return %c0_i32, %c0_i32_0 : i32, i32
  }
  func.func @transform_3(%arg0: i32) -> (i32, i32) {
    %c0_i32 = arith.constant 0 : i32
    %c0_i32_0 = arith.constant 0 : i32
    %c0_i32_1 = arith.constant 0 : i32
    return %c0_i32, %c0_i32_0 : i32, i32
  }
  func.func @transform_4(%arg0: i32) -> (i32, i32) {
    %c0_i32 = arith.constant 0 : i32
    %c0_i32_0 = arith.constant 0 : i32
    %c0_i32_1 = arith.constant 0 : i32
    return %c0_i32, %c0_i32_0 : i32, i32
  }
  func.func @transform_5(%arg0: i32) -> (i32, i32) {
    %c0_i32 = arith.constant 0 : i32
    %c0_i32_0 = arith.constant 0 : i32
    %c0_i32_1 = arith.constant 0 : i32
    return %c0_i32, %c0_i32_0 : i32, i32
  }
  func.func @transform_6(%arg0: i32) -> (i32, i32) {
    %c0_i32 = arith.constant 0 : i32
    %c0_i32_0 = arith.constant 0 : i32
    %c0_i32_1 = arith.constant 0 : i32
    return %c0_i32, %c0_i32_0 : i32, i32
  }
  func.func @transform_7(%arg0: i32) -> (i32, i32) {
    %c0_i32 = arith.constant 0 : i32
    %c0_i32_0 = arith.constant 0 : i32
    %c0_i32_1 = arith.constant 0 : i32
    return %c0_i32, %c0_i32_0 : i32, i32
  }
  func.func @transform_8(%arg0: i32) -> (i32, i32) {
    %c0_i32 = arith.constant 0 : i32
    %c0_i32_0 = arith.constant 0 : i32
    %c0_i32_1 = arith.constant 0 : i32
    return %c0_i32, %c0_i32_0 : i32, i32
  }
  func.func @transform_9(%arg0: i32) -> (i32, i32) {
    %c0_i32 = arith.constant 0 : i32
    %c0_i32_0 = arith.constant 0 : i32
    %c0_i32_1 = arith.constant 0 : i32
    return %c0_i32, %c0_i32_0 : i32, i32
  }
  func.func @transform_10(%arg0: i32) -> (i32, i32) {
    %c0_i32 = arith.constant 0 : i32
    %c0_i32_0 = arith.constant 0 : i32
    %c0_i32_1 = arith.constant 0 : i32
    return %c0_i32, %c0_i32_0 : i32, i32
  }
  func.func @transform_11(%arg0: i32) -> (i32, i32, i32) {
    %c0_i32 = arith.constant 0 : i32
    %c0_i32_0 = arith.constant 0 : i32
    %c0_i32_1 = arith.constant 0 : i32
    return %arg0, %c0_i32, %c0_i32_0 : i32, i32, i32
  }
  func.func @transform_12(%arg0: i32) -> (i32, i32, i32) {
    %c0_i32 = arith.constant 0 : i32
    %c0_i32_0 = arith.constant 0 : i32
    %c0_i32_1 = arith.constant 0 : i32
    return %arg0, %c0_i32, %c0_i32_0 : i32, i32, i32
  }
}

</mosaic_0001>

<llo_original>
// kernel: tpu_custom_call.1
$region0: #{tpu_custom_call.1}
  #allocation0 [shape = 'u32[]', space=smem, size = 0x4, offset = 0x4, fixed_abs, tag = 'smem constant byte address 0x4 - core index']
  #allocation1 [shape = 'u32[144,128]{1,0:T(1,128)}', space=vmem, size = 0x12000, scoped, tag = 'internal scratch']
  %s0 = inlined_call_operand.hbm [shape: f32[2,16,64], index: 0, kind: input, shape index: {}]
  %s1 = inlined_call_operand.hbm [shape: f32[64,256], index: 1, kind: input, shape index: {}]
  %s2 = inlined_call_operand.hbm [shape: f32[1,256], index: 2, kind: input, shape index: {}]
  %s3 = inlined_call_operand.hbm [shape: f32[1152,128], index: 3, kind: input, shape index: {}]
  %s4 = inlined_call_operand.hbm [shape: f32[1,128], index: 4, kind: input, shape index: {}]
  %s5 = inlined_call_operand.hbm [shape: f32[2176,128], index: 5, kind: input, shape index: {}]
  %s6 = inlined_call_operand.hbm [shape: f32[1,128], index: 6, kind: input, shape index: {}]
  %s7 = inlined_call_operand.hbm [shape: f32[64,128], index: 7, kind: input, shape index: {}]
  %s8 = inlined_call_operand.hbm [shape: f32[1,128], index: 8, kind: input, shape index: {}]
  %s9 = inlined_call_operand.hbm [shape: f32[64,128], index: 9, kind: input, shape index: {}]
  %s10 = inlined_call_operand.hbm [shape: f32[1,128], index: 10, kind: input, shape index: {}]
  %s11 = inlined_call_operand.hbm [shape: f32[2,16,128], index: 11, kind: output, shape index: {0}]
  %s12 = inlined_call_operand.hbm [shape: f32[2,16,128], index: 12, kind: output, shape index: {1}]
  %13 = xla_tuple %s11, %s12
  %s14 = sld [smem:[#allocation0]]
  $region129: #{tpu_custom_call.1} parent=0
    _
  %s16 = ssub.s32 1, %s14
  %s17 = scalar_select 0, %s16, %s14
  $region1: #{tpu_custom_call.1} parent=0
    #allocation2 [shape = 'u8[16384]{0}', space=vmem, size = 0x4000, scoped, tag = 'input window, operand 0']
    #allocation3 [shape = 's32[2]{0}', space=sflag, size = 0x8, scoped, tag = 'scoped memory for tpu_custom_call.1']
    #allocation4 [shape = 's32[2]{0}', space=sflag, size = 0x8, scoped, tag = 'scoped memory for tpu_custom_call.1']
    #allocation5 [shape = 'u8[65536]{0}', space=vmem, size = 0x10000, scoped, tag = 'input window, operand 1, single buffered']
    #allocation6 [shape = 's32[1]{0}', space=sflag, size = 0x4, scoped, tag = 'scoped memory for tpu_custom_call.1']
    #allocation7 [shape = 'u8[1024]{0}', space=vmem, size = 0x400, scoped, tag = 'input window, operand 2, single buffered']
    #allocation8 [shape = 'u8[589824]{0}', space=vmem, size = 0x90000, scoped, tag = 'input window, operand 3, single buffered']
    #allocation9 [shape = 's32[1]{0}', space=sflag, size = 0x4, scoped, tag = 'scoped memory for tpu_custom_call.1']
    #allocation10 [shape = 'u8[512]{0}', space=vmem, size = 0x400, scoped, tag = 'input window, operand 4, single buffered']
    #allocation11 [shape = 'u8[1114112]{0}', space=vmem, size = 0x110000, scoped, tag = 'input window, operand 5, single buffered']
    #allocation12 [shape = 's32[1]{0}', space=sflag, size = 0x4, scoped, tag = 'scoped memory for tpu_custom_call.1']
    #allocation13 [shape = 'u8[512]{0}', space=vmem, size = 0x400, scoped, tag = 'input window, operand 6, single buffered']
    #allocation14 [shape = 'u8[32768]{0}', space=vmem, size = 0x8000, scoped, tag = 'input window, operand 7, single buffered']
    #allocation15 [shape = 's32[1]{0}', space=sflag, size = 0x4, scoped, tag = 'scoped memory for tpu_custom_call.1']
    #allocation16 [shape = 'u8[512]{0}', space=vmem, size = 0x400, scoped, tag = 'input window, operand 8, single buffered']
    #allocation17 [shape = 'u8[32768]{0}', space=vmem, size = 0x8000, scoped, tag = 'input window, operand 9, single buffered']
    #allocation18 [shape = 's32[1]{0}', space=sflag, size = 0x4, scoped, tag = 'scoped memory for tpu_custom_call.1']
    #allocation19 [shape = 'u8[512]{0}', space=vmem, size = 0x400, scoped, tag = 'input window, operand 10, single buffered']
    #allocation20 [shape = 'u8[16384]{0}', space=vmem, size = 0x4000, scoped, tag = 'output window, operand 0']
    #allocation21 [shape = 'u8[16384]{0}', space=vmem, size = 0x4000, scoped, tag = 'output window, operand 1']
    #allocation22 [shape = 's32[2]{0}', space=sflag, size = 0x8, scoped, tag = 'scoped memory for tpu_custom_call.1']
    %18 = vsyncpa [#allocation3], 0
    %s19 = scalar_lea.sflag [#allocation3], 1
    %20 = vsyncpa %s19, 0
    %21 = vsyncpa [#allocation6], 0
    %22 = vsyncpa [#allocation9], 0
    %23 = vsyncpa [#allocation12], 0
    %24 = vsyncpa [#allocation15], 0
    %25 = vsyncpa [#allocation18], 0
    %26 = vsyncpa [#allocation4], 0
    %s27 = scalar_lea.sflag [#allocation4], 1
    %28 = vsyncpa %s27, 0
    %29 = vsyncpa [#allocation22], 0
    %s30 = scalar_lea.sflag [#allocation22], 1
    %31 = vsyncpa %s30, 0
    loop: start=0, step=1, limit=4
    $region2: #{tpu_custom_call.1} parent=1 // loop_pre_header
      _
    $region3: #{tpu_custom_call.1} parent=1 // loop_header
      %s33 = sphi 0, %s37
      %p34 = scmp.ge.s32.totalorder %s33, 4
      %s43 = sphi 0, %s45
      %s46 = sphi 0, %s43
      %s47 = sphi 0, %s46
      %s63 = sphi 0, %s47
      %s67 = sphi 0, %s67
      %s69 = sphi 0, %s67
      %s70 = sphi 0, %s69
      %s84 = sphi 0, %s70
      %s88 = sphi 0, %s88
      %s90 = sphi 0, %s88
      %s91 = sphi 0, %s90
      %s105 = sphi 0, %s91
      %s109 = sphi 0, %s109
      %s111 = sphi 0, %s109
      %s112 = sphi 0, %s111
      %s126 = sphi 0, %s112
      %s130 = sphi 0, %s130
      %s132 = sphi 0, %s130
      %s133 = sphi 0, %s132
      %s147 = sphi 0, %s133
      %s151 = sphi 0, %s151
      %s153 = sphi 0, %s151
      %s154 = sphi 0, %s153
      %s168 = sphi 0, %s154
      %s172 = sphi 0, %s172
      %s174 = sphi 0, %s172
      %s175 = sphi 0, %s174
      %s189 = sphi 0, %s175
      %s193 = sphi 0, %s193
      %s195 = sphi 0, %s193
      %s196 = sphi 0, %s195
      %s210 = sphi 0, %s196
      %s214 = sphi 0, %s214
      %s216 = sphi 0, %s214
      %s217 = sphi 0, %s216
      %s231 = sphi 0, %s217
      %s235 = sphi 0, %s235
      %s237 = sphi 0, %s235
      %s238 = sphi 0, %s237
      %s252 = sphi 0, %s238
      %s256 = sphi 0, %s256
      %s258 = sphi 0, %s256
      %s259 = sphi 0, %s258
      %s273 = sphi 0, %s259
      %s279 = sphi 0, %s281
      %s282 = sphi 0, %s279
      %s283 = sphi 0, %s282
      %s299 = sphi 0, %s283
      %s305 = sphi 0, %s307
      %s308 = sphi 0, %s305
      %s309 = sphi 0, %s308
      %s325 = sphi 0, %s309
    $region4: #{tpu_custom_call.1} parent=1 // loop_header_branch
      %36 = sbr.rel (%p34) target = $region8
    $region5: #{tpu_custom_call.1} parent=1 // loop_body
      %s38 = ssub.s32 %s33, 1
      %s39 = ssub.s32 %s33, 2
      %s40 = sadd.s32 %s33, 1
      %s41 = ssub.s32 %s33, %s40
      %p42 = scmp.eq.s32.totalorder %s41, 0
      %s44 = sadd.s32 %s43, 1
      %s45 = scalar_select %p42, %s43, %s44
      %p48 = pneg %p42
      %p49 = scmp.eq.s32.totalorder %s33, 1
      %p50 = por %p48, %p49
      %p51 = scmp.ne.s32.totalorder %s43, %s46
      %p52 = scmp.eq.s32.totalorder %s33, 0
      %p53 = por %p51, %p52
      %p54 = scmp.ne.s32.totalorder %s43, %s46
      %p55 = scmp.eq.s32.totalorder %s38, 1
      %p56 = por %p54, %p55
      %p57 = scmp.ne.s32.totalorder %s46, %s47
      %p58 = scmp.eq.s32.totalorder %s38, 0
      %p59 = por %p57, %p58
      %p60 = scmp.ne.s32.totalorder %s46, %s47
      %p61 = scmp.eq.s32.totalorder %s39, 1
      %p62 = por %p60, %p61
      %p64 = scmp.ne.s32.totalorder %s47, %s63
      %p65 = scmp.eq.s32.totalorder %s39, 0
      %p66 = por %p64, %p65
      %s68 = sadd.s32 %s67, 1
      %p71 = scmp.eq.s32.totalorder %s33, 1
      %p72 = scmp.ne.s32.totalorder %s67, %s69
      %p73 = scmp.eq.s32.totalorder %s33, 0
      %p74 = por %p72, %p73
      %p75 = scmp.ne.s32.totalorder %s67, %s69
      %p76 = scmp.eq.s32.totalorder %s38, 1
      %p77 = por %p75, %p76
      %p78 = scmp.ne.s32.totalorder %s69, %s70
      %p79 = scmp.eq.s32.totalorder %s38, 0
      %p80 = por %p78, %p79
      %p81 = scmp.ne.s32.totalorder %s69, %s70
      %p82 = scmp.eq.s32.totalorder %s39, 1
      %p83 = por %p81, %p82
      %p85 = scmp.ne.s32.totalorder %s70, %s84
      %p86 = scmp.eq.s32.totalorder %s39, 0
      %p87 = por %p85, %p86
      %s89 = sadd.s32 %s88, 1
      %p92 = scmp.eq.s32.totalorder %s33, 1
      %p93 = scmp.ne.s32.totalorder %s88, %s90
      %p94 = scmp.eq.s32.totalorder %s33, 0
      %p95 = por %p93, %p94
      %p96 = scmp.ne.s32.totalorder %s88, %s90
      %p97 = scmp.eq.s32.totalorder %s38, 1
      %p98 = por %p96, %p97
      %p99 = scmp.ne.s32.totalorder %s90, %s91
      %p100 = scmp.eq.s32.totalorder %s38, 0
      %p101 = por %p99, %p100
      %p102 = scmp.ne.s32.totalorder %s90, %s91
      %p103 = scmp.eq.s32.totalorder %s39, 1
      %p104 = por %p102, %p103
      %p106 = scmp.ne.s32.totalorder %s91, %s105
      %p107 = scmp.eq.s32.totalorder %s39, 0
      %p108 = por %p106, %p107
      %s110 = sadd.s32 %s109, 1
      %p113 = scmp.eq.s32.totalorder %s33, 1
      %p114 = scmp.ne.s32.totalorder %s109, %s111
      %p115 = scmp.eq.s32.totalorder %s33, 0
      %p116 = por %p114, %p115
      %p117 = scmp.ne.s32.totalorder %s109, %s111
      %p118 = scmp.eq.s32.totalorder %s38, 1
      %p119 = por %p117, %p118
      %p120 = scmp.ne.s32.totalorder %s111, %s112
      %p121 = scmp.eq.s32.totalorder %s38, 0
      %p122 = por %p120, %p121
      %p123 = scmp.ne.s32.totalorder %s111, %s112
      %p124 = scmp.eq.s32.totalorder %s39, 1
      %p125 = por %p123, %p124
      %p127 = scmp.ne.s32.totalorder %s112, %s126
      %p128 = scmp.eq.s32.totalorder %s39, 0
      %p129 = por %p127, %p128
      %s131 = sadd.s32 %s130, 1
      %p134 = scmp.eq.s32.totalorder %s33, 1
      %p135 = scmp.ne.s32.totalorder %s130, %s132
      %p136 = scmp.eq.s32.totalorder %s33, 0
      %p137 = por %p135, %p136
      %p138 = scmp.ne.s32.totalorder %s130, %s132
      %p139 = scmp.eq.s32.totalorder %s38, 1
      %p140 = por %p138, %p139
      %p141 = scmp.ne.s32.totalorder %s132, %s133
      %p142 = scmp.eq.s32.totalorder %s38, 0
      %p143 = por %p141, %p142
      %p144 = scmp.ne.s32.totalorder %s132, %s133
      %p145 = scmp.eq.s32.totalorder %s39, 1
      %p146 = por %p144, %p145
      %p148 = scmp.ne.s32.totalorder %s133, %s147
      %p149 = scmp.eq.s32.totalorder %s39, 0
      %p150 = por %p148, %p149
      %s152 = sadd.s32 %s151, 1
      %p155 = scmp.eq.s32.totalorder %s33, 1
      %p156 = scmp.ne.s32.totalorder %s151, %s153
      %p157 = scmp.eq.s32.totalorder %s33, 0
      %p158 = por %p156, %p157
      %p159 = scmp.ne.s32.totalorder %s151, %s153
      %p160 = scmp.eq.s32.totalorder %s38, 1
      %p161 = por %p159, %p160
      %p162 = scmp.ne.s32.totalorder %s153, %s154
      %p163 = scmp.eq.s32.totalorder %s38, 0
      %p164 = por %p162, %p163
      %p165 = scmp.ne.s32.totalorder %s153, %s154
      %p166 = scmp.eq.s32.totalorder %s39, 1
      %p167 = por %p165, %p166
      %p169 = scmp.ne.s32.totalorder %s154, %s168
      %p170 = scmp.eq.s32.totalorder %s39, 0
      %p171 = por %p169, %p170
      %s173 = sadd.s32 %s172, 1
      %p176 = scmp.eq.s32.totalorder %s33, 1
      %p177 = scmp.ne.s32.totalorder %s172, %s174
      %p178 = scmp.eq.s32.totalorder %s33, 0
      %p179 = por %p177, %p178
      %p180 = scmp.ne.s32.totalorder %s172, %s174
      %p181 = scmp.eq.s32.totalorder %s38, 1
      %p182 = por %p180, %p181
      %p183 = scmp.ne.s32.totalorder %s174, %s175
      %p184 = scmp.eq.s32.totalorder %s38, 0
      %p185 = por %p183, %p184
      %p186 = scmp.ne.s32.totalorder %s174, %s175
      %p187 = scmp.eq.s32.totalorder %s39, 1
      %p188 = por %p186, %p187
      %p190 = scmp.ne.s32.totalorder %s175, %s189
      %p191 = scmp.eq.s32.totalorder %s39, 0
      %p192 = por %p190, %p191
      %s194 = sadd.s32 %s193, 1
      %p197 = scmp.eq.s32.totalorder %s33, 1
      %p198 = scmp.ne.s32.totalorder %s193, %s195
      %p199 = scmp.eq.s32.totalorder %s33, 0
      %p200 = por %p198, %p199
      %p201 = scmp.ne.s32.totalorder %s193, %s195
      %p202 = scmp.eq.s32.totalorder %s38, 1
      %p203 = por %p201, %p202
      %p204 = scmp.ne.s32.totalorder %s195, %s196
      %p205 = scmp.eq.s32.totalorder %s38, 0
      %p206 = por %p204, %p205
      %p207 = scmp.ne.s32.totalorder %s195, %s196
      %p208 = scmp.eq.s32.totalorder %s39, 1
      %p209 = por %p207, %p208
      %p211 = scmp.ne.s32.totalorder %s196, %s210
      %p212 = scmp.eq.s32.totalorder %s39, 0
      %p213 = por %p211, %p212
      %s215 = sadd.s32 %s214, 1
      %p218 = scmp.eq.s32.totalorder %s33, 1
      %p219 = scmp.ne.s32.totalorder %s214, %s216
      %p220 = scmp.eq.s32.totalorder %s33, 0
      %p221 = por %p219, %p220
      %p222 = scmp.ne.s32.totalorder %s214, %s216
      %p223 = scmp.eq.s32.totalorder %s38, 1
      %p224 = por %p222, %p223
      %p225 = scmp.ne.s32.totalorder %s216, %s217
      %p226 = scmp.eq.s32.totalorder %s38, 0
      %p227 = por %p225, %p226
      %p228 = scmp.ne.s32.totalorder %s216, %s217
      %p229 = scmp.eq.s32.totalorder %s39, 1
      %p230 = por %p228, %p229
      %p232 = scmp.ne.s32.totalorder %s217, %s231
      %p233 = scmp.eq.s32.totalorder %s39, 0
      %p234 = por %p232, %p233
      %s236 = sadd.s32 %s235, 1
      %p239 = scmp.eq.s32.totalorder %s33, 1
      %p240 = scmp.ne.s32.totalorder %s235, %s237
      %p241 = scmp.eq.s32.totalorder %s33, 0
      %p242 = por %p240, %p241
      %p243 = scmp.ne.s32.totalorder %s235, %s237
      %p244 = scmp.eq.s32.totalorder %s38, 1
      %p245 = por %p243, %p244
      %p246 = scmp.ne.s32.totalorder %s237, %s238
      %p247 = scmp.eq.s32.totalorder %s38, 0
      %p248 = por %p246, %p247
      %p249 = scmp.ne.s32.totalorder %s237, %s238
      %p250 = scmp.eq.s32.totalorder %s39, 1
      %p251 = por %p249, %p250
      %p253 = scmp.ne.s32.totalorder %s238, %s252
      %p254 = scmp.eq.s32.totalorder %s39, 0
      %p255 = por %p253, %p254
      %s257 = sadd.s32 %s256, 1
      %p260 = scmp.eq.s32.totalorder %s33, 1
      %p261 = scmp.ne.s32.totalorder %s256, %s258
      %p262 = scmp.eq.s32.totalorder %s33, 0
      %p263 = por %p261, %p262
      %p264 = scmp.ne.s32.totalorder %s256, %s258
      %p265 = scmp.eq.s32.totalorder %s38, 1
      %p266 = por %p264, %p265
      %p267 = scmp.ne.s32.totalorder %s258, %s259
      %p268 = scmp.eq.s32.totalorder %s38, 0
      %p269 = por %p267, %p268
      %p270 = scmp.ne.s32.totalorder %s258, %s259
      %p271 = scmp.eq.s32.totalorder %s39, 1
      %p272 = por %p270, %p271
      %p274 = scmp.ne.s32.totalorder %s259, %s273
      %p275 = scmp.eq.s32.totalorder %s39, 0
      %p276 = por %p274, %p275
      %s277 = ssub.s32 %s33, %s40
      %p278 = scmp.eq.s32.totalorder %s277, 0
      %s280 = sadd.s32 %s279, 1
      %s281 = scalar_select %p278, %s279, %s280
      %p284 = pneg %p278
      %p285 = scmp.eq.s32.totalorder %s33, 1
      %p286 = por %p284, %p285
      %p287 = scmp.ne.s32.totalorder %s279, %s282
      %p288 = scmp.eq.s32.totalorder %s33, 0
      %p289 = por %p287, %p288
      %p290 = scmp.ne.s32.totalorder %s279, %s282
      %p291 = scmp.eq.s32.totalorder %s38, 1
      %p292 = por %p290, %p291
      %p293 = scmp.ne.s32.totalorder %s282, %s283
      %p294 = scmp.eq.s32.totalorder %s38, 0
      %p295 = por %p293, %p294
      %p296 = scmp.ne.s32.totalorder %s282, %s283
      %p297 = scmp.eq.s32.totalorder %s39, 1
      %p298 = por %p296, %p297
      %p300 = scmp.ne.s32.totalorder %s283, %s299
      %p301 = scmp.eq.s32.totalorder %s39, 0
      %p302 = por %p300, %p301
      %s303 = ssub.s32 %s33, %s40
      %p304 = scmp.eq.s32.totalorder %s303, 0
      %s306 = sadd.s32 %s305, 1
      %s307 = scalar_select %p304, %s305, %s306
      %p310 = pneg %p304
      %p311 = scmp.eq.s32.totalorder %s33, 1
      %p312 = por %p310, %p311
      %p313 = scmp.ne.s32.totalorder %s305, %s308
      %p314 = scmp.eq.s32.totalorder %s33, 0
      %p315 = por %p313, %p314
      %p316 = scmp.ne.s32.totalorder %s305, %s308
      %p317 = scmp.eq.s32.totalorder %s38, 1
      %p318 = por %p316, %p317
      %p319 = scmp.ne.s32.totalorder %s308, %s309
      %p320 = scmp.eq.s32.totalorder %s38, 0
      %p321 = por %p319, %p320
      %p322 = scmp.ne.s32.totalorder %s308, %s309
      %p323 = scmp.eq.s32.totalorder %s39, 1
      %p324 = por %p322, %p323
      %p326 = scmp.ne.s32.totalorder %s309, %s325
      %p327 = scmp.eq.s32.totalorder %s39, 0
      %p328 = por %p326, %p327
      %p329 = scmp.le.s32.totalorder 1, %s33
      %p330 = scmp.lt.s32.totalorder %s33, 3
      %p331 = pnand %p329, %p330
      %p332 = pneg %p331
      // Predicated region
      $region9: #{tpu_custom_call.1} parent=5 // pred_check
        _
      $region10: #{tpu_custom_call.1} parent=5 // pred_check_branch
        %334 = sbr.rel (%p331) target = $region12
      $region11: #{tpu_custom_call.1} parent=5 // pred_region
        %s335 = ssub.s32 %s33, 1
        // Predicated region
        $region13: #{tpu_custom_call.1} parent=11 // pred_check
          %p336 = pneg %p80
        $region14: #{tpu_custom_call.1} parent=11 // pred_check_branch
          %338 = sbr.rel (%p336) target = $region16
        $region15: #{tpu_custom_call.1} parent=11 // pred_region
          %s340 = ssub.s32 2048, 2048
          %341 = vsyncadd [#allocation6], %s340
          %s342 = sshll.u32 [#allocation5], 4
          %s343 = int_to_ptr.vmem [resolvable:$true] %s342
          %348 = dma.hbm_to_vmem [thread:$0]  %s1, 2048, %s343, [#allocation6], 256, 256, 16
        $region16: #{tpu_custom_call.1} parent=11 // pred_fallthru
          _
        // Predicated region
        $region17: #{tpu_custom_call.1} parent=11 // pred_check
          %p349 = pneg %p101
        $region18: #{tpu_custom_call.1} parent=11 // pred_check_branch
          %351 = sbr.rel (%p349) target = $region20
        $region19: #{tpu_custom_call.1} parent=11 // pred_region
          %s353 = ssub.s32 32, 32
          %354 = vsyncadd [#allocation6], %s353
          %s356 = sshll.u32 [#allocation7], 4
          %s357 = int_to_ptr.vmem [resolvable:$true] %s356
          %359 = dma.hbm_to_vmem [thread:$0]  %s2, 32, %s357, [#allocation6]
        $region20: #{tpu_custom_call.1} parent=11 // pred_fallthru
          _
        // Predicated region
        $region21: #{tpu_custom_call.1} parent=11 // pred_check
          %p360 = pneg %p122
        $region22: #{tpu_custom_call.1} parent=11 // pred_check_branch
          %362 = sbr.rel (%p360) target = $region24
        $region23: #{tpu_custom_call.1} parent=11 // pred_region
          %s364 = ssub.s32 18432, 18432
          %365 = vsyncadd [#allocation9], %s364
          %s366 = sshll.u32 [#allocation8], 4
          %s367 = int_to_ptr.vmem [resolvable:$true] %s366
          %372 = dma.hbm_to_vmem [thread:$0]  %s3, 18432, %s367, [#allocation9], 128, 128, 8
        $region24: #{tpu_custom_call.1} parent=11 // pred_fallthru
          _
        // Predicated region
        $region25: #{tpu_custom_call.1} parent=11 // pred_check
          %p373 = pneg %p143
        $region26: #{tpu_custom_call.1} parent=11 // pred_check_branch
          %375 = sbr.rel (%p373) target = $region28
        $region27: #{tpu_custom_call.1} parent=11 // pred_region
          %s377 = ssub.s32 16, 16
          %378 = vsyncadd [#allocation9], %s377
          %s380 = sshll.u32 [#allocation10], 4
          %s381 = int_to_ptr.vmem [resolvable:$true] %s380
          %383 = dma.hbm_to_vmem [thread:$0]  %s4, 16, %s381, [#allocation9]
        $region28: #{tpu_custom_call.1} parent=11 // pred_fallthru
          _
        // Predicated region
        $region29: #{tpu_custom_call.1} parent=11 // pred_check
          %p384 = pneg %p164
        $region30: #{tpu_custom_call.1} parent=11 // pred_check_branch
          %386 = sbr.rel (%p384) target = $region32
        $region31: #{tpu_custom_call.1} parent=11 // pred_region
          %s388 = ssub.s32 34816, 34816
          %389 = vsyncadd [#allocation12], %s388
          %s390 = sshll.u32 [#allocation11], 4
          %s391 = int_to_ptr.vmem [resolvable:$true] %s390
          %396 = dma.hbm_to_vmem [thread:$0]  %s5, 34816, %s391, [#allocation12], 128, 128, 8
        $region32: #{tpu_custom_call.1} parent=11 // pred_fallthru
          _
        // Predicated region
        $region33: #{tpu_custom_call.1} parent=11 // pred_check
          %p397 = pneg %p185
        $region34: #{tpu_custom_call.1} parent=11 // pred_check_branch
          %399 = sbr.rel (%p397) target = $region36
        $region35: #{tpu_custom_call.1} parent=11 // pred_region
          %s401 = ssub.s32 16, 16
          %402 = vsyncadd [#allocation12], %s401
          %s404 = sshll.u32 [#allocation13], 4
          %s405 = int_to_ptr.vmem [resolvable:$true] %s404
          %407 = dma.hbm_to_vmem [thread:$0]  %s6, 16, %s405, [#allocation12]
        $region36: #{tpu_custom_call.1} parent=11 // pred_fallthru
          _
        // Predicated region
        $region37: #{tpu_custom_call.1} parent=11 // pred_check
          %p408 = pneg %p206
        $region38: #{tpu_custom_call.1} parent=11 // pred_check_branch
          %410 = sbr.rel (%p408) target = $region40
        $region39: #{tpu_custom_call.1} parent=11 // pred_region
          %s412 = ssub.s32 1024, 1024
          %413 = vsyncadd [#allocation15], %s412
          %s414 = sshll.u32 [#allocation14], 4
          %s415 = int_to_ptr.vmem [resolvable:$true] %s414
          %420 = dma.hbm_to_vmem [thread:$0]  %s7, 1024, %s415, [#allocation15], 128, 128, 8
        $region40: #{tpu_custom_call.1} parent=11 // pred_fallthru
          _
        // Predicated region
        $region41: #{tpu_custom_call.1} parent=11 // pred_check
          %p421 = pneg %p227
        $region42: #{tpu_custom_call.1} parent=11 // pred_check_branch
          %423 = sbr.rel (%p421) target = $region44
        $region43: #{tpu_custom_call.1} parent=11 // pred_region
          %s425 = ssub.s32 16, 16
          %426 = vsyncadd [#allocation15], %s425
          %s428 = sshll.u32 [#allocation16], 4
          %s429 = int_to_ptr.vmem [resolvable:$true] %s428
          %431 = dma.hbm_to_vmem [thread:$0]  %s8, 16, %s429, [#allocation15]
        $region44: #{tpu_custom_call.1} parent=11 // pred_fallthru
          _
        // Predicated region
        $region45: #{tpu_custom_call.1} parent=11 // pred_check
          %p432 = pneg %p248
        $region46: #{tpu_custom_call.1} parent=11 // pred_check_branch
          %434 = sbr.rel (%p432) target = $region48
        $region47: #{tpu_custom_call.1} parent=11 // pred_region
          %s436 = ssub.s32 1024, 1024
          %437 = vsyncadd [#allocation18], %s436
          %s438 = sshll.u32 [#allocation17], 4
          %s439 = int_to_ptr.vmem [resolvable:$true] %s438
          %444 = dma.hbm_to_vmem [thread:$0]  %s9, 1024, %s439, [#allocation18], 128, 128, 8
        $region48: #{tpu_custom_call.1} parent=11 // pred_fallthru
          _
        // Predicated region
        $region49: #{tpu_custom_call.1} parent=11 // pred_check
          %p445 = pneg %p269
        $region50: #{tpu_custom_call.1} parent=11 // pred_check_branch
          %447 = sbr.rel (%p445) target = $region52
        $region51: #{tpu_custom_call.1} parent=11 // pred_region
          %s449 = ssub.s32 16, 16
          %450 = vsyncadd [#allocation18], %s449
          %s452 = sshll.u32 [#allocation19], 4
          %s453 = int_to_ptr.vmem [resolvable:$true] %s452
          %455 = dma.hbm_to_vmem [thread:$0]  %s10, 16, %s453, [#allocation18]
        $region52: #{tpu_custom_call.1} parent=11 // pred_fallthru
          _
      $region12: #{tpu_custom_call.1} parent=5 // pred_fallthru
        _
      %p456 = scmp.lt.s32.totalorder %s33, 2
      // Predicated region
      $region53: #{tpu_custom_call.1} parent=5 // pred_check
        %p457 = pneg %p456
      $region54: #{tpu_custom_call.1} parent=5 // pred_check_branch
        %459 = sbr.rel (%p457) target = $region56
      $region55: #{tpu_custom_call.1} parent=5 // pred_region
        // Predicated region
        $region57: #{tpu_custom_call.1} parent=55 // pred_check
          %p460 = pneg %p53
        $region58: #{tpu_custom_call.1} parent=55 // pred_check_branch
          %462 = sbr.rel (%p460) target = $region60
        $region59: #{tpu_custom_call.1} parent=55 // pred_region
          %s463 = sand.u32 %s43, 1
          %s464 = scalar_lea.sflag [#allocation3], %s463
          %s465 = sand.u32 %s43, 1
          %s466 = smul.addr %s465, 16
          %s467 = scalar_lea.vmem [#allocation2], %s466
          %s469 = ssub.s32 256, 256
          %470 = vsyncadd %s464, %s469
          %s471 = smul.addr %s33, 2
          %s472 = smul.addr %s471, 128
          %s473 = scalar_lea.hbm %s0, %s472
          %s474 = sshll.u32 %s467, 4
          %s475 = int_to_ptr.vmem [resolvable:$true] %s474
          %480 = dma.hbm_to_vmem [thread:$0]  %s473, 256, %s475, %s464, 128, 128, 8
        $region60: #{tpu_custom_call.1} parent=55 // pred_fallthru
          _
      $region56: #{tpu_custom_call.1} parent=5 // pred_fallthru
        _
      %p481 = scmp.le.s32.totalorder 1, %s33
      %p482 = scmp.lt.s32.totalorder %s33, 3
      %p483 = pnand %p481, %p482
      %p484 = pneg %p483
      // Predicated region
      $region61: #{tpu_custom_call.1} parent=5 // pred_check
        _
      $region62: #{tpu_custom_call.1} parent=5 // pred_check_branch
        %486 = sbr.rel (%p483) target = $region64
      $region63: #{tpu_custom_call.1} parent=5 // pred_region
        %s487 = ssub.s32 %s33, 1
        %s488 = sand.u32 %s46, 1
        %s489 = scalar_lea.sflag [#allocation3], %s488
        %s490 = sand.u32 %s46, 1
        %s491 = smul.addr %s490, 16
        %s492 = scalar_lea.vmem [#allocation2], %s491
        // Predicated region
        $region65: #{tpu_custom_call.1} parent=63 // pred_check
          %p493 = pneg %p59
        $region66: #{tpu_custom_call.1} parent=63 // pred_check_branch
          %495 = sbr.rel (%p493) target = $region68
        $region67: #{tpu_custom_call.1} parent=63 // pred_region
          %496 = dma.done %s489, 256
        $region68: #{tpu_custom_call.1} parent=63 // pred_fallthru
          _
        // Predicated region
        $region69: #{tpu_custom_call.1} parent=63 // pred_check
          %p497 = pneg %p80
        $region70: #{tpu_custom_call.1} parent=63 // pred_check_branch
          %499 = sbr.rel (%p497) target = $region72
        $region71: #{tpu_custom_call.1} parent=63 // pred_region
          %500 = dma.done [#allocation6], 2048
        $region72: #{tpu_custom_call.1} parent=63 // pred_fallthru
          _
        // Predicated region
        $region73: #{tpu_custom_call.1} parent=63 // pred_check
          %p501 = pneg %p101
        $region74: #{tpu_custom_call.1} parent=63 // pred_check_branch
          %503 = sbr.rel (%p501) target = $region76
        $region75: #{tpu_custom_call.1} parent=63 // pred_region
          %504 = dma.done [#allocation6], 32
        $region76: #{tpu_custom_call.1} parent=63 // pred_fallthru
          _
        // Predicated region
        $region77: #{tpu_custom_call.1} parent=63 // pred_check
          %p505 = pneg %p122
        $region78: #{tpu_custom_call.1} parent=63 // pred_check_branch
          %507 = sbr.rel (%p505) target = $region80
        $region79: #{tpu_custom_call.1} parent=63 // pred_region
          %508 = dma.done [#allocation9], 18432
        $region80: #{tpu_custom_call.1} parent=63 // pred_fallthru
          _
        // Predicated region
        $region81: #{tpu_custom_call.1} parent=63 // pred_check
          %p509 = pneg %p143
        $region82: #{tpu_custom_call.1} parent=63 // pred_check_branch
          %511 = sbr.rel (%p509) target = $region84
        $region83: #{tpu_custom_call.1} parent=63 // pred_region
          %512 = dma.done [#allocation9], 16
        $region84: #{tpu_custom_call.1} parent=63 // pred_fallthru
          _
        // Predicated region
        $region85: #{tpu_custom_call.1} parent=63 // pred_check
          %p513 = pneg %p164
        $region86: #{tpu_custom_call.1} parent=63 // pred_check_branch
          %515 = sbr.rel (%p513) target = $region88
        $region87: #{tpu_custom_call.1} parent=63 // pred_region
          %516 = dma.done [#allocation12], 34816
        $region88: #{tpu_custom_call.1} parent=63 // pred_fallthru
          _
        // Predicated region
        $region89: #{tpu_custom_call.1} parent=63 // pred_check
          %p517 = pneg %p185
        $region90: #{tpu_custom_call.1} parent=63 // pred_check_branch
          %519 = sbr.rel (%p517) target = $region92
        $region91: #{tpu_custom_call.1} parent=63 // pred_region
          %520 = dma.done [#allocation12], 16
        $region92: #{tpu_custom_call.1} parent=63 // pred_fallthru
          _
        // Predicated region
        $region93: #{tpu_custom_call.1} parent=63 // pred_check
          %p521 = pneg %p206
        $region94: #{tpu_custom_call.1} parent=63 // pred_check_branch
          %523 = sbr.rel (%p521) target = $region96
        $region95: #{tpu_custom_call.1} parent=63 // pred_region
          %524 = dma.done [#allocation15], 1024
        $region96: #{tpu_custom_call.1} parent=63 // pred_fallthru
          _
        // Predicated region
        $region97: #{tpu_custom_call.1} parent=63 // pred_check
          %p525 = pneg %p227
        $region98: #{tpu_custom_call.1} parent=63 // pred_check_branch
          %527 = sbr.rel (%p525) target = $region100
        $region99: #{tpu_custom_call.1} parent=63 // pred_region
          %528 = dma.done [#allocation15], 16
        $region100: #{tpu_custom_call.1} parent=63 // pred_fallthru
          _
        // Predicated region
        $region101: #{tpu_custom_call.1} parent=63 // pred_check
          %p529 = pneg %p248
        $region102: #{tpu_custom_call.1} parent=63 // pred_check_branch
          %531 = sbr.rel (%p529) target = $region104
        $region103: #{tpu_custom_call.1} parent=63 // pred_region
          %532 = dma.done [#allocation18], 1024
        $region104: #{tpu_custom_call.1} parent=63 // pred_fallthru
          _
        // Predicated region
        $region105: #{tpu_custom_call.1} parent=63 // pred_check
          %p533 = pneg %p269
        $region106: #{tpu_custom_call.1} parent=63 // pred_check_branch
          %535 = sbr.rel (%p533) target = $region108
        $region107: #{tpu_custom_call.1} parent=63 // pred_region
          %536 = dma.done [#allocation18], 16
        $region108: #{tpu_custom_call.1} parent=63 // pred_fallthru
          _
        %s537 = sand.u32 %s46, 1
        %s538 = scalar_lea.sflag [#allocation3], %s537
        %s539 = sand.u32 %s46, 1
        %s540 = smul.addr %s539, 16
        %s541 = scalar_lea.vmem [#allocation2], %s540
        %p542 = pneg %p59
        %p543 = pneg %p56
        %p544 = pneg %p80
        %p545 = pneg %p77
        %p546 = pneg %p101
        %p547 = pneg %p98
        %p548 = pneg %p122
        %p549 = pneg %p119
        %p550 = pneg %p143
        %p551 = pneg %p140
        %p552 = pneg %p164
        %p553 = pneg %p161
        %p554 = pneg %p185
        %p555 = pneg %p182
        %p556 = pneg %p206
        %p557 = pneg %p203
        %p558 = pneg %p227
        %p559 = pneg %p224
        %p560 = pneg %p248
        %p561 = pneg %p245
        %p562 = pneg %p269
        %p563 = pneg %p266
        %p564 = pneg %p295
        %p565 = pneg %p292
        %s566 = sand.u32 %s282, 1
        %s567 = scalar_lea.sflag [#allocation4], %s566
        %s568 = sand.u32 %s282, 1
        %s569 = smul.addr %s568, 16
        %s570 = scalar_lea.vmem [#allocation20], %s569
        %p571 = pneg %p321
        %p572 = pneg %p318
        %s573 = sand.u32 %s308, 1
        %s574 = scalar_lea.sflag [#allocation22], %s573
        %s575 = sand.u32 %s308, 1
        %s576 = smul.addr %s575, 16
        %s577 = scalar_lea.vmem [#allocation21], %s576
        %v578 = vld [vmem:[%s492] sm:$0xff]
        %v579 = vld [vmem:[%s492 + $0x8] sm:$0xff]
        %v580 = vld [vmem:[#allocation5] sm:$0xff]
        %v581 = vld [vmem:[#allocation5 + $0x8] sm:$0xff]
        %v582 = vld [vmem:[#allocation5 + $0x10] sm:$0xff]
        %v583 = vld [vmem:[#allocation5 + $0x18] sm:$0xff]
        %v584 = vld [vmem:[#allocation5 + $0x20] sm:$0xff]
        %v585 = vld [vmem:[#allocation5 + $0x28] sm:$0xff]
        %v586 = vld [vmem:[#allocation5 + $0x30] sm:$0xff]
        %v587 = vld [vmem:[#allocation5 + $0x38] sm:$0xff]
        %v588 = vld [vmem:[#allocation5 + $0x40] sm:$0xff]
        %v589 = vld [vmem:[#allocation5 + $0x48] sm:$0xff]
        %v590 = vld [vmem:[#allocation5 + $0x50] sm:$0xff]
        %v591 = vld [vmem:[#allocation5 + $0x58] sm:$0xff]
        %v592 = vld [vmem:[#allocation5 + $0x60] sm:$0xff]
        %v593 = vld [vmem:[#allocation5 + $0x68] sm:$0xff]
        %v594 = vld [vmem:[#allocation5 + $0x70] sm:$0xff]
        %v595 = vld [vmem:[#allocation5 + $0x78] sm:$0xff]
        %v596 = vld [vmem:[#allocation7] sm:$0x3]
        %v598 = vlaneseq
        %v599 = vshrl.u32 %v598, 7
        %v600 = vsub.s32 0, %v599
        %v601 = vrot.slane %v596, %v600
        %v602 = vlaneseq
        %v603 = vshrl.u32 %v602, 7
        %v604 = vsub.s32 1, %v603
        %v605 = vrot.slane %v596, %v604
        %vm608 = vcmask 523264
        %v610 = vsel %vm608, %v578, 0
        %v613 = vsel %vm608, %v579, 0
        %615 = vmatprep.subr.mxu0 0.0
        %616 = vmatpush1.msra.mxu0 0.0
        %617 = vmatprep.subr.mxu0 0.0
        %618 = vmatpush1.msra.mxu0 0.0
        %619 = vmatprep.subr.mxu0 0.0
        %620 = vmatpush1.msra.mxu0 0.0
        %621 = vmatprep.subr.mxu0 0.0
        %622 = vmatpush1.msra.mxu0 0.0
        %623 = vmatprep.subr.mxu0 0.0
        %624 = vmatpush1.msra.mxu0 0.0
        %625 = vmatprep.subr.mxu0 0.0
        %626 = vmatpush1.msra.mxu0 0.0
        %627 = vmatprep.subr.mxu0 0.0
        %628 = vmatpush1.msra.mxu0 0.0
        %629 = vmatprep.subr.mxu0 0.0
        %630 = vmatpush1.msra.mxu0 0.0
        %631 = vmatprep.subr.mxu0 %v595
        %632 = vmatpush1.msra.mxu0 %v594
        %633 = vmatprep.subr.mxu0 %v593
        %634 = vmatpush1.msra.mxu0 %v592
        %635 = vmatprep.subr.mxu0 %v591
        %636 = vmatpush1.msra.mxu0 %v590
        %637 = vmatprep.subr.mxu0 %v589
        %638 = vmatpush1.msra.mxu0 %v588
        %639 = vmatprep.subr.mxu0 %v587
        %640 = vmatpush1.msra.mxu0 %v586
        %641 = vmatprep.subr.mxu0 %v585
        %642 = vmatpush1.msra.mxu0 %v584
        %643 = vmatprep.subr.mxu0 %v583
        %644 = vmatpush1.msra.mxu0 %v582
        %645 = vmatprep.subr.mxu0 %v581
        %646 = vmatpush1.msra.mxu0 %v580
        %647 = vmatprep.subr.mxu0 0.0
        %648 = vmatpush2.msra.mxu0 0.0
        %649 = vmatprep.subr.mxu0 0.0
        %650 = vmatpush2.msra.mxu0 0.0
        %651 = vmatprep.subr.mxu0 0.0
        %652 = vmatpush2.msra.mxu0 0.0
        %653 = vmatprep.subr.mxu0 0.0
        %654 = vmatpush2.msra.mxu0 0.0
        %655 = vmatprep.subr.mxu0 0.0
        %656 = vmatpush2.msra.mxu0 0.0
        %657 = vmatprep.subr.mxu0 0.0
        %658 = vmatpush2.msra.mxu0 0.0
        %659 = vmatprep.subr.mxu0 0.0
        %660 = vmatpush2.msra.mxu0 0.0
        %661 = vmatprep.subr.mxu0 0.0
        %662 = vmatpush2.msra.mxu0 0.0
        %663 = vmatprep.subr.mxu0 0.0
        %664 = vmatpush2.msra.mxu0 0.0
        %665 = vmatprep.subr.mxu0 0.0
        %666 = vmatpush2.msra.mxu0 0.0
        %667 = vmatprep.subr.mxu0 0.0
        %668 = vmatpush2.msra.mxu0 0.0
        %669 = vmatprep.subr.mxu0 0.0
        %670 = vmatpush2.msra.mxu0 0.0
        %671 = vmatprep.subr.mxu0 0.0
        %672 = vmatpush2.msra.mxu0 0.0
        %673 = vmatprep.subr.mxu0 0.0
        %674 = vmatpush2.msra.mxu0 0.0
        %675 = vmatprep.subr.mxu0 0.0
        %676 = vmatpush2.msra.mxu0 0.0
        %677 = vmatprep.subr.mxu0 0.0
        %678 = vmatpush2.msra.mxu0 0.0
        %679 = vmatprep.mubr.f32.mxu0 0.0
        %680 = vmatmul.mubr.f32.gmra.mxu0 %v610
        %v681 = vpop.f32.mrf.mxu0
        %v682 = vadd.f32 %v601, %v681
        %v683 = vpop.f32.mrf.mxu0
        %v684 = vadd.f32 %v605, %v683
        %685 = vmatprep.mubr.f32.mxu0 0.0
        %686 = vmatmul.mubr.f32.gmra.mxu0 %v613
        %v687 = vpop.f32.mrf.mxu0
        %v688 = vadd.f32 %v601, %v687
        %v689 = vpop.f32.mrf.mxu0
        %v690 = vadd.f32 %v605, %v689
        %691 = vdwg.mxu0
        %v692 = vmax.f32 %v682, 0.0
        %v693 = vmax.f32 %v684, 0.0
        %v694 = vmax.f32 %v688, 0.0
        %v695 = vmax.f32 %v690, 0.0
        %v696 = vld [vmem:[#allocation8] sm:$0xff]
        %v697 = vld [vmem:[#allocation8 + $0x8] sm:$0xff]
        %v698 = vld [vmem:[#allocation8 + $0x10] sm:$0xff]
        %v699 = vld [vmem:[#allocation8 + $0x18] sm:$0xff]
        %v700 = vld [vmem:[#allocation8 + $0x20] sm:$0xff]
        %v701 = vld [vmem:[#allocation8 + $0x28] sm:$0xff]
        %v702 = vld [vmem:[#allocation8 + $0x30] sm:$0xff]
        %v703 = vld [vmem:[#allocation8 + $0x38] sm:$0xff]
        %v704 = vld [vmem:[#allocation8 + $0x40] sm:$0xff]
        %v705 = vld [vmem:[#allocation8 + $0x48] sm:$0xff]
        %v706 = vld [vmem:[#allocation8 + $0x50] sm:$0xff]
        %v707 = vld [vmem:[#allocation8 + $0x58] sm:$0xff]
        %v708 = vld [vmem:[#allocation8 + $0x60] sm:$0xff]
        %v709 = vld [vmem:[#allocation8 + $0x68] sm:$0xff]
        %v710 = vld [vmem:[#allocation8 + $0x70] sm:$0xff]
        %v711 = vld [vmem:[#allocation8 + $0x78] sm:$0xff]
        %v712 = vld [vmem:[#allocation8 + $0x80] sm:$0xff]
        %v713 = vld [vmem:[#allocation8 + $0x88] sm:$0xff]
        %v714 = vld [vmem:[#allocation8 + $0x90] sm:$0xff]
        %v715 = vld [vmem:[#allocation8 + $0x98] sm:$0xff]
        %v716 = vld [vmem:[#allocation8 + $0xa0] sm:$0xff]
        %v717 = vld [vmem:[#allocation8 + $0xa8] sm:$0xff]
        %v718 = vld [vmem:[#allocation8 + $0xb0] sm:$0xff]
        %v719 = vld [vmem:[#allocation8 + $0xb8] sm:$0xff]
        %v720 = vld [vmem:[#allocation8 + $0xc0] sm:$0xff]
        %v721 = vld [vmem:[#allocation8 + $0xc8] sm:$0xff]
        %v722 = vld [vmem:[#allocation8 + $0xd0] sm:$0xff]
        %v723 = vld [vmem:[#allocation8 + $0xd8] sm:$0xff]
        %v724 = vld [vmem:[#allocation8 + $0xe0] sm:$0xff]
        %v725 = vld [vmem:[#allocation8 + $0xe8] sm:$0xff]
        %v726 = vld [vmem:[#allocation8 + $0xf0] sm:$0xff]
        %v727 = vld [vmem:[#allocation8 + $0xf8] sm:$0xff]
        %v728 = vld [vmem:[#allocation8 + $0x100] sm:$0xff]
        %v729 = vld [vmem:[#allocation8 + $0x108] sm:$0xff]
        %v730 = vld [vmem:[#allocation8 + $0x110] sm:$0xff]
        %v731 = vld [vmem:[#allocation8 + $0x118] sm:$0xff]
        %v732 = vld [vmem:[#allocation8 + $0x120] sm:$0xff]
        %v733 = vld [vmem:[#allocation8 + $0x128] sm:$0xff]
        %v734 = vld [vmem:[#allocation8 + $0x130] sm:$0xff]
        %v735 = vld [vmem:[#allocation8 + $0x138] sm:$0xff]
        %v736 = vld [vmem:[#allocation8 + $0x140] sm:$0xff]
        %v737 = vld [vmem:[#allocation8 + $0x148] sm:$0xff]
        %v738 = vld [vmem:[#allocation8 + $0x150] sm:$0xff]
        %v739 = vld [vmem:[#allocation8 + $0x158] sm:$0xff]
        %v740 = vld [vmem:[#allocation8 + $0x160] sm:$0xff]
        %v741 = vld [vmem:[#allocation8 + $0x168] sm:$0xff]
        %v742 = vld [vmem:[#allocation8 + $0x170] sm:$0xff]
        %v743 = vld [vmem:[#allocation8 + $0x178] sm:$0xff]
        %v744 = vld [vmem:[#allocation8 + $0x180] sm:$0xff]
        %v745 = vld [vmem:[#allocation8 + $0x188] sm:$0xff]
        %v746 = vld [vmem:[#allocation8 + $0x190] sm:$0xff]
        %v747 = vld [vmem:[#allocation8 + $0x198] sm:$0xff]
        %v748 = vld [vmem:[#allocation8 + $0x1a0] sm:$0xff]
        %v749 = vld [vmem:[#allocation8 + $0x1a8] sm:$0xff]
        %v750 = vld [vmem:[#allocation8 + $0x1b0] sm:$0xff]
        %v751 = vld [vmem:[#allocation8 + $0x1b8] sm:$0xff]
        %v752 = vld [vmem:[#allocation8 + $0x1c0] sm:$0xff]
        %v753 = vld [vmem:[#allocation8 + $0x1c8] sm:$0xff]
        %v754 = vld [vmem:[#allocation8 + $0x1d0] sm:$0xff]
        %v755 = vld [vmem:[#allocation8 + $0x1d8] sm:$0xff]
        %v756 = vld [vmem:[#allocation8 + $0x1e0] sm:$0xff]
        %v757 = vld [vmem:[#allocation8 + $0x1e8] sm:$0xff]
        %v758 = vld [vmem:[#allocation8 + $0x1f0] sm:$0xff]
        %v759 = vld [vmem:[#allocation8 + $0x1f8] sm:$0xff]
        %v760 = vld [vmem:[#allocation8 + $0x200] sm:$0xff]
        %v761 = vld [vmem:[#allocation8 + $0x208] sm:$0xff]
        %v762 = vld [vmem:[#allocation8 + $0x210] sm:$0xff]
        %v763 = vld [vmem:[#allocation8 + $0x218] sm:$0xff]
        %v764 = vld [vmem:[#allocation8 + $0x220] sm:$0xff]
        %v765 = vld [vmem:[#allocation8 + $0x228] sm:$0xff]
        %v766 = vld [vmem:[#allocation8 + $0x230] sm:$0xff]
        %v767 = vld [vmem:[#allocation8 + $0x238] sm:$0xff]
        %v768 = vld [vmem:[#allocation8 + $0x240] sm:$0xff]
        %v769 = vld [vmem:[#allocation8 + $0x248] sm:$0xff]
        %v770 = vld [vmem:[#allocation8 + $0x250] sm:$0xff]
        %v771 = vld [vmem:[#allocation8 + $0x258] sm:$0xff]
        %v772 = vld [vmem:[#allocation8 + $0x260] sm:$0xff]
        %v773 = vld [vmem:[#allocation8 + $0x268] sm:$0xff]
        %v774 = vld [vmem:[#allocation8 + $0x270] sm:$0xff]
        %v775 = vld [vmem:[#allocation8 + $0x278] sm:$0xff]
        %v776 = vld [vmem:[#allocation8 + $0x280] sm:$0xff]
        %v777 = vld [vmem:[#allocation8 + $0x288] sm:$0xff]
        %v778 = vld [vmem:[#allocation8 + $0x290] sm:$0xff]
        %v779 = vld [vmem:[#allocation8 + $0x298] sm:$0xff]
        %v780 = vld [vmem:[#allocation8 + $0x2a0] sm:$0xff]
        %v781 = vld [vmem:[#allocation8 + $0x2a8] sm:$0xff]
        %v782 = vld [vmem:[#allocation8 + $0x2b0] sm:$0xff]
        %v783 = vld [vmem:[#allocation8 + $0x2b8] sm:$0xff]
        %v784 = vld [vmem:[#allocation8 + $0x2c0] sm:$0xff]
        %v785 = vld [vmem:[#allocation8 + $0x2c8] sm:$0xff]
        %v786 = vld [vmem:[#allocation8 + $0x2d0] sm:$0xff]
        %v787 = vld [vmem:[#allocation8 + $0x2d8] sm:$0xff]
        %v788 = vld [vmem:[#allocation8 + $0x2e0] sm:$0xff]
        %v789 = vld [vmem:[#allocation8 + $0x2e8] sm:$0xff]
        %v790 = vld [vmem:[#allocation8 + $0x2f0] sm:$0xff]
        %v791 = vld [vmem:[#allocation8 + $0x2f8] sm:$0xff]
        %v792 = vld [vmem:[#allocation8 + $0x300] sm:$0xff]
        %v793 = vld [vmem:[#allocation8 + $0x308] sm:$0xff]
        %v794 = vld [vmem:[#allocation8 + $0x310] sm:$0xff]
        %v795 = vld [vmem:[#allocation8 + $0x318] sm:$0xff]
        %v796 = vld [vmem:[#allocation8 + $0x320] sm:$0xff]
        %v797 = vld [vmem:[#allocation8 + $0x328] sm:$0xff]
        %v798 = vld [vmem:[#allocation8 + $0x330] sm:$0xff]
        %v799 = vld [vmem:[#allocation8 + $0x338] sm:$0xff]
        %v800 = vld [vmem:[#allocation8 + $0x340] sm:$0xff]
        %v801 = vld [vmem:[#allocation8 + $0x348] sm:$0xff]
        %v802 = vld [vmem:[#allocation8 + $0x350] sm:$0xff]
        %v803 = vld [vmem:[#allocation8 + $0x358] sm:$0xff]
        %v804 = vld [vmem:[#allocation8 + $0x360] sm:$0xff]
        %v805 = vld [vmem:[#allocation8 + $0x368] sm:$0xff]
        %v806 = vld [vmem:[#allocation8 + $0x370] sm:$0xff]
        %v807 = vld [vmem:[#allocation8 + $0x378] sm:$0xff]
        %v808 = vld [vmem:[#allocation8 + $0x380] sm:$0xff]
        %v809 = vld [vmem:[#allocation8 + $0x388] sm:$0xff]
        %v810 = vld [vmem:[#allocation8 + $0x390] sm:$0xff]
        %v811 = vld [vmem:[#allocation8 + $0x398] sm:$0xff]
        %v812 = vld [vmem:[#allocation8 + $0x3a0] sm:$0xff]
        %v813 = vld [vmem:[#allocation8 + $0x3a8] sm:$0xff]
        %v814 = vld [vmem:[#allocation8 + $0x3b0] sm:$0xff]
        %v815 = vld [vmem:[#allocation8 + $0x3b8] sm:$0xff]
        %v816 = vld [vmem:[#allocation8 + $0x3c0] sm:$0xff]
        %v817 = vld [vmem:[#allocation8 + $0x3c8] sm:$0xff]
        %v818 = vld [vmem:[#allocation8 + $0x3d0] sm:$0xff]
        %v819 = vld [vmem:[#allocation8 + $0x3d8] sm:$0xff]
        %v820 = vld [vmem:[#allocation8 + $0x3e0] sm:$0xff]
        %v821 = vld [vmem:[#allocation8 + $0x3e8] sm:$0xff]
        %v822 = vld [vmem:[#allocation8 + $0x3f0] sm:$0xff]
        %v823 = vld [vmem:[#allocation8 + $0x3f8] sm:$0xff]
        %v824 = vld [vmem:[#allocation8 + $0x400] sm:$0xff]
        %v825 = vld [vmem:[#allocation8 + $0x408] sm:$0xff]
        %v826 = vld [vmem:[#allocation8 + $0x410] sm:$0xff]
        %v827 = vld [vmem:[#allocation8 + $0x418] sm:$0xff]
        %v828 = vld [vmem:[#allocation8 + $0x420] sm:$0xff]
        %v829 = vld [vmem:[#allocation8 + $0x428] sm:$0xff]
        %v830 = vld [vmem:[#allocation8 + $0x430] sm:$0xff]
        %v831 = vld [vmem:[#allocation8 + $0x438] sm:$0xff]
        %v832 = vld [vmem:[#allocation8 + $0x440] sm:$0xff]
        %v833 = vld [vmem:[#allocation8 + $0x448] sm:$0xff]
        %v834 = vld [vmem:[#allocation8 + $0x450] sm:$0xff]
        %v835 = vld [vmem:[#allocation8 + $0x458] sm:$0xff]
        %v836 = vld [vmem:[#allocation8 + $0x460] sm:$0xff]
        %v837 = vld [vmem:[#allocation8 + $0x468] sm:$0xff]
        %v838 = vld [vmem:[#allocation8 + $0x470] sm:$0xff]
        %v839 = vld [vmem:[#allocation8 + $0x478] sm:$0xff]
        %v840 = vld [vmem:[#allocation10] sm:$0x1]
        %vm843 = vcmask 1043456
        %v844 = vrot.slane %v692, 4
        %v845 = vrot.slane %v694, 4
        %v846 = vsel %vm843, %v844, %v845
        %v850 = vsel %vm843, 0.0, %v844
        %v851 = vsel %vm843, %v845, 0.0
        %vm854 = vcmask 1046528
        %v855 = vrot.slane %v850, 1
        %v856 = vrot.slane %v846, 1
        %v857 = vsel %vm854, %v855, %v856
        %v858 = vrot.slane %v851, 1
        %v859 = vsel %vm854, %v856, %v858
        %vm862 = vcmask 1045504
        %v863 = vrot.slane %v850, 2
        %v864 = vrot.slane %v846, 2
        %v865 = vsel %vm862, %v863, %v864
        %v866 = vrot.slane %v851, 2
        %v867 = vsel %vm862, %v864, %v866
        %vm870 = vcmask 1044480
        %v871 = vrot.slane %v850, 3
        %v872 = vrot.slane %v846, 3
        %v873 = vsel %vm870, %v871, %v872
        %v874 = vrot.slane %v851, 3
        %v875 = vsel %vm870, %v872, %v874
        %v878 = vrot.slane %v850, 4
        %v879 = vrot.slane %v846, 4
        %v880 = vsel %vm843, %v878, %v879
        %v881 = vrot.slane %v851, 4
        %v882 = vsel %vm843, %v879, %v881
        %vm885 = vcmask 1042432
        %v886 = vrot.slane %v850, 5
        %v887 = vrot.slane %v846, 5
        %v888 = vsel %vm885, %v886, %v887
        %v889 = vrot.slane %v851, 5
        %v890 = vsel %vm885, %v887, %v889
        %vm893 = vcmask 1041408
        %v894 = vrot.slane %v850, 6
        %v895 = vrot.slane %v846, 6
        %v896 = vsel %vm893, %v894, %v895
        %v897 = vrot.slane %v851, 6
        %v898 = vsel %vm893, %v895, %v897
        %vm901 = vcmask 1040384
        %v902 = vrot.slane %v850, 7
        %v903 = vrot.slane %v846, 7
        %v904 = vsel %vm901, %v902, %v903
        %v905 = vrot.slane %v851, 7
        %v906 = vsel %vm901, %v903, %v905
        %v910 = vlaneseq
        %v911 = vshrl.u32 %v910, 7
        %v912 = vsub.s32 0, %v911
        %v913 = vrot.slane %v840, %v912
        %915 = vmatprep.subr.mxu0 0.0
        %916 = vmatpush1.msra.mxu0 %v711
        %917 = vmatprep.subr.mxu0 0.0
        %918 = vmatpush1.msra.mxu0 %v710
        %919 = vmatprep.subr.mxu0 0.0
        %920 = vmatpush1.msra.mxu0 %v709
        %921 = vmatprep.subr.mxu0 0.0
        %922 = vmatpush1.msra.mxu0 %v708
        %923 = vmatprep.subr.mxu0 0.0
        %924 = vmatpush1.msra.mxu0 %v707
        %925 = vmatprep.subr.mxu0 0.0
        %926 = vmatpush1.msra.mxu0 %v706
        %927 = vmatprep.subr.mxu0 0.0
        %928 = vmatpush1.msra.mxu0 %v705
        %929 = vmatprep.subr.mxu0 0.0
        %930 = vmatpush1.msra.mxu0 %v704
        %931 = vmatprep.subr.mxu0 0.0
        %932 = vmatpush1.msra.mxu0 %v703
        %933 = vmatprep.subr.mxu0 0.0
        %934 = vmatpush1.msra.mxu0 %v702
        %935 = vmatprep.subr.mxu0 0.0
        %936 = vmatpush1.msra.mxu0 %v701
        %937 = vmatprep.subr.mxu0 0.0
        %938 = vmatpush1.msra.mxu0 %v700
        %939 = vmatprep.subr.mxu0 0.0
        %940 = vmatpush1.msra.mxu0 %v699
        %941 = vmatprep.subr.mxu0 0.0
        %942 = vmatpush1.msra.mxu0 %v698
        %943 = vmatprep.subr.mxu0 0.0
        %944 = vmatpush1.msra.mxu0 %v697
        %945 = vmatprep.subr.mxu0 0.0
        %946 = vmatpush1.msra.mxu0 %v696
        %947 = vmatprep.subr.mxu0 0.0
        %948 = vmatpush2.msra.mxu0 %v727
        %949 = vmatprep.subr.mxu0 0.0
        %950 = vmatpush2.msra.mxu0 %v726
        %951 = vmatprep.subr.mxu0 0.0
        %952 = vmatpush2.msra.mxu0 %v725
        %953 = vmatprep.subr.mxu0 0.0
        %954 = vmatpush2.msra.mxu0 %v724
        %955 = vmatprep.subr.mxu0 0.0
        %956 = vmatpush2.msra.mxu0 %v723
        %957 = vmatprep.subr.mxu0 0.0
        %958 = vmatpush2.msra.mxu0 %v722
        %959 = vmatprep.subr.mxu0 0.0
        %960 = vmatpush2.msra.mxu0 %v721
        %961 = vmatprep.subr.mxu0 0.0
        %962 = vmatpush2.msra.mxu0 %v720
        %963 = vmatprep.subr.mxu0 0.0
        %964 = vmatpush2.msra.mxu0 %v719
        %965 = vmatprep.subr.mxu0 0.0
        %966 = vmatpush2.msra.mxu0 %v718
        %967 = vmatprep.subr.mxu0 0.0
        %968 = vmatpush2.msra.mxu0 %v717
        %969 = vmatprep.subr.mxu0 0.0
        %970 = vmatpush2.msra.mxu0 %v716
        %971 = vmatprep.subr.mxu0 0.0
        %972 = vmatpush2.msra.mxu0 %v715
        %973 = vmatprep.subr.mxu0 0.0
        %974 = vmatpush2.msra.mxu0 %v714
        %975 = vmatprep.subr.mxu0 0.0
        %976 = vmatpush2.msra.mxu0 %v713
        %977 = vmatprep.subr.mxu0 0.0
        %978 = vmatpush2.msra.mxu0 %v712
        %979 = vmatprep.mubr.f32.mxu0 %v857
        %980 = vmatmul.mubr.f32.gmra.mxu0 %v850
        %v981 = vpop.f32.mrf.mxu0
        %v982 = vadd.f32 %v913, %v981
        %v983 = vpop.f32.mrf.mxu0
        %984 = vmatprep.mubr.f32.mxu0 %v859
        %985 = vmatmul.mubr.f32.gmra.mxu0 %v846
        %v986 = vpop.f32.mrf.mxu0
        %v987 = vadd.f32 %v913, %v986
        %v988 = vpop.f32.mrf.mxu0
        %989 = vdwg.mxu0
        %990 = vmatprep.subr.mxu0 0.0
        %991 = vmatpush1.msra.mxu0 %v743
        %992 = vmatprep.subr.mxu0 0.0
        %993 = vmatpush1.msra.mxu0 %v742
        %994 = vmatprep.subr.mxu0 0.0
        %995 = vmatpush1.msra.mxu0 %v741
        %996 = vmatprep.subr.mxu0 0.0
        %997 = vmatpush1.msra.mxu0 %v740
        %998 = vmatprep.subr.mxu0 0.0
        %999 = vmatpush1.msra.mxu0 %v739
        %1000 = vmatprep.subr.mxu0 0.0
        %1001 = vmatpush1.msra.mxu0 %v738
        %1002 = vmatprep.subr.mxu0 0.0
        %1003 = vmatpush1.msra.mxu0 %v737
        %1004 = vmatprep.subr.mxu0 0.0
        %1005 = vmatpush1.msra.mxu0 %v736
        %1006 = vmatprep.subr.mxu0 0.0
        %1007 = vmatpush1.msra.mxu0 %v735
        %1008 = vmatprep.subr.mxu0 0.0
        %1009 = vmatpush1.msra.mxu0 %v734
        %1010 = vmatprep.subr.mxu0 0.0
        %1011 = vmatpush1.msra.mxu0 %v733
        %1012 = vmatprep.subr.mxu0 0.0
        %1013 = vmatpush1.msra.mxu0 %v732
        %1014 = vmatprep.subr.mxu0 0.0
        %1015 = vmatpush1.msra.mxu0 %v731
        %1016 = vmatprep.subr.mxu0 0.0
        %1017 = vmatpush1.msra.mxu0 %v730
        %1018 = vmatprep.subr.mxu0 0.0
        %1019 = vmatpush1.msra.mxu0 %v729
        %1020 = vmatprep.subr.mxu0 0.0
        %1021 = vmatpush1.msra.mxu0 %v728
        %1022 = vmatprep.subr.mxu0 0.0
        %1023 = vmatpush2.msra.mxu0 %v759
        %1024 = vmatprep.subr.mxu0 0.0
        %1025 = vmatpush2.msra.mxu0 %v758
        %1026 = vmatprep.subr.mxu0 0.0
        %1027 = vmatpush2.msra.mxu0 %v757
        %1028 = vmatprep.subr.mxu0 0.0
        %1029 = vmatpush2.msra.mxu0 %v756
        %1030 = vmatprep.subr.mxu0 0.0
        %1031 = vmatpush2.msra.mxu0 %v755
        %1032 = vmatprep.subr.mxu0 0.0
        %1033 = vmatpush2.msra.mxu0 %v754
        %1034 = vmatprep.subr.mxu0 0.0
        %1035 = vmatpush2.msra.mxu0 %v753
        %1036 = vmatprep.subr.mxu0 0.0
        %1037 = vmatpush2.msra.mxu0 %v752
        %1038 = vmatprep.subr.mxu0 0.0
        %1039 = vmatpush2.msra.mxu0 %v751
        %1040 = vmatprep.subr.mxu0 0.0
        %1041 = vmatpush2.msra.mxu0 %v750
        %1042 = vmatprep.subr.mxu0 0.0
        %1043 = vmatpush2.msra.mxu0 %v749
        %1044 = vmatprep.subr.mxu0 0.0
        %1045 = vmatpush2.msra.mxu0 %v748
        %1046 = vmatprep.subr.mxu0 0.0
        %1047 = vmatpush2.msra.mxu0 %v747
        %1048 = vmatprep.subr.mxu0 0.0
        %1049 = vmatpush2.msra.mxu0 %v746
        %1050 = vmatprep.subr.mxu0 0.0
        %1051 = vmatpush2.msra.mxu0 %v745
        %1052 = vmatprep.subr.mxu0 0.0
        %1053 = vmatpush2.msra.mxu0 %v744
        %1054 = vmatprep.mubr.f32.mxu0 %v873
        %1055 = vmatmul.mubr.f32.gmra.mxu0 %v865
        %v1056 = vpop.f32.mrf.mxu0
        %v1057 = vadd.f32 %v982, %v1056
        %v1058 = vpop.f32.mrf.mxu0
        %1059 = vmatprep.mubr.f32.mxu0 %v875
        %1060 = vmatmul.mubr.f32.gmra.mxu0 %v867
        %v1061 = vpop.f32.mrf.mxu0
        %v1062 = vadd.f32 %v987, %v1061
        %v1063 = vpop.f32.mrf.mxu0
        %1064 = vdwg.mxu0
        %1065 = vmatprep.subr.mxu0 0.0
        %1066 = vmatpush1.msra.mxu0 %v775
        %1067 = vmatprep.subr.mxu0 0.0
        %1068 = vmatpush1.msra.mxu0 %v774
        %1069 = vmatprep.subr.mxu0 0.0
        %1070 = vmatpush1.msra.mxu0 %v773
        %1071 = vmatprep.subr.mxu0 0.0
        %1072 = vmatpush1.msra.mxu0 %v772
        %1073 = vmatprep.subr.mxu0 0.0
        %1074 = vmatpush1.msra.mxu0 %v771
        %1075 = vmatprep.subr.mxu0 0.0
        %1076 = vmatpush1.msra.mxu0 %v770
        %1077 = vmatprep.subr.mxu0 0.0
        %1078 = vmatpush1.msra.mxu0 %v769
        %1079 = vmatprep.subr.mxu0 0.0
        %1080 = vmatpush1.msra.mxu0 %v768
        %1081 = vmatprep.subr.mxu0 0.0
        %1082 = vmatpush1.msra.mxu0 %v767
        %1083 = vmatprep.subr.mxu0 0.0
        %1084 = vmatpush1.msra.mxu0 %v766
        %1085 = vmatprep.subr.mxu0 0.0
        %1086 = vmatpush1.msra.mxu0 %v765
        %1087 = vmatprep.subr.mxu0 0.0
        %1088 = vmatpush1.msra.mxu0 %v764
        %1089 = vmatprep.subr.mxu0 0.0
        %1090 = vmatpush1.msra.mxu0 %v763
        %1091 = vmatprep.subr.mxu0 0.0
        %1092 = vmatpush1.msra.mxu0 %v762
        %1093 = vmatprep.subr.mxu0 0.0
        %1094 = vmatpush1.msra.mxu0 %v761
        %1095 = vmatprep.subr.mxu0 0.0
        %1096 = vmatpush1.msra.mxu0 %v760
        %1097 = vmatprep.subr.mxu0 0.0
        %1098 = vmatpush2.msra.mxu0 %v791
        %1099 = vmatprep.subr.mxu0 0.0
        %1100 = vmatpush2.msra.mxu0 %v790
        %1101 = vmatprep.subr.mxu0 0.0
        %1102 = vmatpush2.msra.mxu0 %v789
        %1103 = vmatprep.subr.mxu0 0.0
        %1104 = vmatpush2.msra.mxu0 %v788
        %1105 = vmatprep.subr.mxu0 0.0
        %1106 = vmatpush2.msra.mxu0 %v787
        %1107 = vmatprep.subr.mxu0 0.0
        %1108 = vmatpush2.msra.mxu0 %v786
        %1109 = vmatprep.subr.mxu0 0.0
        %1110 = vmatpush2.msra.mxu0 %v785
        %1111 = vmatprep.subr.mxu0 0.0
        %1112 = vmatpush2.msra.mxu0 %v784
        %1113 = vmatprep.subr.mxu0 0.0
        %1114 = vmatpush2.msra.mxu0 %v783
        %1115 = vmatprep.subr.mxu0 0.0
        %1116 = vmatpush2.msra.mxu0 %v782
        %1117 = vmatprep.subr.mxu0 0.0
        %1118 = vmatpush2.msra.mxu0 %v781
        %1119 = vmatprep.subr.mxu0 0.0
        %1120 = vmatpush2.msra.mxu0 %v780
        %1121 = vmatprep.subr.mxu0 0.0
        %1122 = vmatpush2.msra.mxu0 %v779
        %1123 = vmatprep.subr.mxu0 0.0
        %1124 = vmatpush2.msra.mxu0 %v778
        %1125 = vmatprep.subr.mxu0 0.0
        %1126 = vmatpush2.msra.mxu0 %v777
        %1127 = vmatprep.subr.mxu0 0.0
        %1128 = vmatpush2.msra.mxu0 %v776
        %1129 = vmatprep.mubr.f32.mxu0 %v888
        %1130 = vmatmul.mubr.f32.gmra.mxu0 %v880
        %v1131 = vpop.f32.mrf.mxu0
        %v1132 = vadd.f32 %v1057, %v1131
        %v1133 = vpop.f32.mrf.mxu0
        %1134 = vmatprep.mubr.f32.mxu0 %v890
        %1135 = vmatmul.mubr.f32.gmra.mxu0 %v882
        %v1136 = vpop.f32.mrf.mxu0
        %v1137 = vadd.f32 %v1062, %v1136
        %v1138 = vpop.f32.mrf.mxu0
        %1139 = vdwg.mxu0
        %1140 = vmatprep.subr.mxu0 0.0
        %1141 = vmatpush1.msra.mxu0 %v807
        %1142 = vmatprep.subr.mxu0 0.0
        %1143 = vmatpush1.msra.mxu0 %v806
        %1144 = vmatprep.subr.mxu0 0.0
        %1145 = vmatpush1.msra.mxu0 %v805
        %1146 = vmatprep.subr.mxu0 0.0
        %1147 = vmatpush1.msra.mxu0 %v804
        %1148 = vmatprep.subr.mxu0 0.0
        %1149 = vmatpush1.msra.mxu0 %v803
        %1150 = vmatprep.subr.mxu0 0.0
        %1151 = vmatpush1.msra.mxu0 %v802
        %1152 = vmatprep.subr.mxu0 0.0
        %1153 = vmatpush1.msra.mxu0 %v801
        %1154 = vmatprep.subr.mxu0 0.0
        %1155 = vmatpush1.msra.mxu0 %v800
        %1156 = vmatprep.subr.mxu0 0.0
        %1157 = vmatpush1.msra.mxu0 %v799
        %1158 = vmatprep.subr.mxu0 0.0
        %1159 = vmatpush1.msra.mxu0 %v798
        %1160 = vmatprep.subr.mxu0 0.0
        %1161 = vmatpush1.msra.mxu0 %v797
        %1162 = vmatprep.subr.mxu0 0.0
        %1163 = vmatpush1.msra.mxu0 %v796
        %1164 = vmatprep.subr.mxu0 0.0
        %1165 = vmatpush1.msra.mxu0 %v795
        %1166 = vmatprep.subr.mxu0 0.0
        %1167 = vmatpush1.msra.mxu0 %v794
        %1168 = vmatprep.subr.mxu0 0.0
        %1169 = vmatpush1.msra.mxu0 %v793
        %1170 = vmatprep.subr.mxu0 0.0
        %1171 = vmatpush1.msra.mxu0 %v792
        %1172 = vmatprep.subr.mxu0 0.0
        %1173 = vmatpush2.msra.mxu0 %v823
        %1174 = vmatprep.subr.mxu0 0.0
        %1175 = vmatpush2.msra.mxu0 %v822
        %1176 = vmatprep.subr.mxu0 0.0
        %1177 = vmatpush2.msra.mxu0 %v821
        %1178 = vmatprep.subr.mxu0 0.0
        %1179 = vmatpush2.msra.mxu0 %v820
        %1180 = vmatprep.subr.mxu0 0.0
        %1181 = vmatpush2.msra.mxu0 %v819
        %1182 = vmatprep.subr.mxu0 0.0
        %1183 = vmatpush2.msra.mxu0 %v818
        %1184 = vmatprep.subr.mxu0 0.0
        %1185 = vmatpush2.msra.mxu0 %v817
        %1186 = vmatprep.subr.mxu0 0.0
        %1187 = vmatpush2.msra.mxu0 %v816
        %1188 = vmatprep.subr.mxu0 0.0
        %1189 = vmatpush2.msra.mxu0 %v815
        %1190 = vmatprep.subr.mxu0 0.0
        %1191 = vmatpush2.msra.mxu0 %v814
        %1192 = vmatprep.subr.mxu0 0.0
        %1193 = vmatpush2.msra.mxu0 %v813
        %1194 = vmatprep.subr.mxu0 0.0
        %1195 = vmatpush2.msra.mxu0 %v812
        %1196 = vmatprep.subr.mxu0 0.0
        %1197 = vmatpush2.msra.mxu0 %v811
        %1198 = vmatprep.subr.mxu0 0.0
        %1199 = vmatpush2.msra.mxu0 %v810
        %1200 = vmatprep.subr.mxu0 0.0
        %1201 = vmatpush2.msra.mxu0 %v809
        %1202 = vmatprep.subr.mxu0 0.0
        %1203 = vmatpush2.msra.mxu0 %v808
        %1204 = vmatprep.mubr.f32.mxu0 %v904
        %1205 = vmatmul.mubr.f32.gmra.mxu0 %v896
        %v1206 = vpop.f32.mrf.mxu0
        %v1207 = vadd.f32 %v1132, %v1206
        %v1208 = vpop.f32.mrf.mxu0
        %1209 = vmatprep.mubr.f32.mxu0 %v906
        %1210 = vmatmul.mubr.f32.gmra.mxu0 %v898
        %v1211 = vpop.f32.mrf.mxu0
        %v1212 = vadd.f32 %v1137, %v1211
        %v1213 = vpop.f32.mrf.mxu0
        %1214 = vdwg.mxu0
        %1215 = vmatprep.subr.mxu0 0.0
        %1216 = vmatpush1.msra.mxu0 %v839
        %1217 = vmatprep.subr.mxu0 0.0
        %1218 = vmatpush1.msra.mxu0 %v838
        %1219 = vmatprep.subr.mxu0 0.0
        %1220 = vmatpush1.msra.mxu0 %v837
        %1221 = vmatprep.subr.mxu0 0.0
        %1222 = vmatpush1.msra.mxu0 %v836
        %1223 = vmatprep.subr.mxu0 0.0
        %1224 = vmatpush1.msra.mxu0 %v835
        %1225 = vmatprep.subr.mxu0 0.0
        %1226 = vmatpush1.msra.mxu0 %v834
        %1227 = vmatprep.subr.mxu0 0.0
        %1228 = vmatpush1.msra.mxu0 %v833
        %1229 = vmatprep.subr.mxu0 0.0
        %1230 = vmatpush1.msra.mxu0 %v832
        %1231 = vmatprep.subr.mxu0 0.0
        %1232 = vmatpush1.msra.mxu0 %v831
        %1233 = vmatprep.subr.mxu0 0.0
        %1234 = vmatpush1.msra.mxu0 %v830
        %1235 = vmatprep.subr.mxu0 0.0
        %1236 = vmatpush1.msra.mxu0 %v829
        %1237 = vmatprep.subr.mxu0 0.0
        %1238 = vmatpush1.msra.mxu0 %v828
        %1239 = vmatprep.subr.mxu0 0.0
        %1240 = vmatpush1.msra.mxu0 %v827
        %1241 = vmatprep.subr.mxu0 0.0
        %1242 = vmatpush1.msra.mxu0 %v826
        %1243 = vmatprep.subr.mxu0 0.0
        %1244 = vmatpush1.msra.mxu0 %v825
        %1245 = vmatprep.subr.mxu0 0.0
        %1246 = vmatpush1.msra.mxu0 %v824
        %1247 = vmatprep.subr.mxu0 0.0
        %1248 = vmatpush2.msra.mxu0 0.0
        %1249 = vmatprep.subr.mxu0 0.0
        %1250 = vmatpush2.msra.mxu0 0.0
        %1251 = vmatprep.subr.mxu0 0.0
        %1252 = vmatpush2.msra.mxu0 0.0
        %1253 = vmatprep.subr.mxu0 0.0
        %1254 = vmatpush2.msra.mxu0 0.0
        %1255 = vmatprep.subr.mxu0 0.0
        %1256 = vmatpush2.msra.mxu0 0.0
        %1257 = vmatprep.subr.mxu0 0.0
        %1258 = vmatpush2.msra.mxu0 0.0
        %1259 = vmatprep.subr.mxu0 0.0
        %1260 = vmatpush2.msra.mxu0 0.0
        %1261 = vmatprep.subr.mxu0 0.0
        %1262 = vmatpush2.msra.mxu0 0.0
        %1263 = vmatprep.subr.mxu0 0.0
        %1264 = vmatpush2.msra.mxu0 0.0
        %1265 = vmatprep.subr.mxu0 0.0
        %1266 = vmatpush2.msra.mxu0 0.0
        %1267 = vmatprep.subr.mxu0 0.0
        %1268 = vmatpush2.msra.mxu0 0.0
        %1269 = vmatprep.subr.mxu0 0.0
        %1270 = vmatpush2.msra.mxu0 0.0
        %1271 = vmatprep.subr.mxu0 0.0
        %1272 = vmatpush2.msra.mxu0 0.0
        %1273 = vmatprep.subr.mxu0 0.0
        %1274 = vmatpush2.msra.mxu0 0.0
        %1275 = vmatprep.subr.mxu0 0.0
        %1276 = vmatpush2.msra.mxu0 0.0
        %1277 = vmatprep.subr.mxu0 0.0
        %1278 = vmatpush2.msra.mxu0 0.0
        %1279 = vmatprep.mubr.f32.mxu0 0.0
        %1280 = vmatmul.mubr.f32.gmra.mxu0 %v846
        %v1281 = vpop.f32.mrf.mxu0
        %v1282 = vadd.f32 %v1207, %v1281
        %v1283 = vpop.f32.mrf.mxu0
        %1284 = vmatprep.mubr.f32.mxu0 0.0
        %1285 = vmatmul.mubr.f32.gmra.mxu0 %v851
        %v1286 = vpop.f32.mrf.mxu0
        %v1287 = vadd.f32 %v1212, %v1286
        %v1288 = vpop.f32.mrf.mxu0
        %1289 = vdwg.mxu0
        %v1290 = vmax.f32 %v1282, 0.0
        %v1291 = vmax.f32 %v1287, 0.0
        %v1292 = vld [vmem:[#allocation11] sm:$0xff]
        %v1293 = vld [vmem:[#allocation11 + $0x8] sm:$0xff]
        %v1294 = vld [vmem:[#allocation11 + $0x10] sm:$0xff]
        %v1295 = vld [vmem:[#allocation11 + $0x18] sm:$0xff]
        %v1296 = vld [vmem:[#allocation11 + $0x20] sm:$0xff]
        %v1297 = vld [vmem:[#allocation11 + $0x28] sm:$0xff]
        %v1298 = vld [vmem:[#allocation11 + $0x30] sm:$0xff]
        %v1299 = vld [vmem:[#allocation11 + $0x38] sm:$0xff]
        %v1300 = vld [vmem:[#allocation11 + $0x40] sm:$0xff]
        %v1301 = vld [vmem:[#allocation11 + $0x48] sm:$0xff]
        %v1302 = vld [vmem:[#allocation11 + $0x50] sm:$0xff]
        %v1303 = vld [vmem:[#allocation11 + $0x58] sm:$0xff]
        %v1304 = vld [vmem:[#allocation11 + $0x60] sm:$0xff]
        %v1305 = vld [vmem:[#allocation11 + $0x68] sm:$0xff]
        %v1306 = vld [vmem:[#allocation11 + $0x70] sm:$0xff]
        %v1307 = vld [vmem:[#allocation11 + $0x78] sm:$0xff]
        %v1308 = vld [vmem:[#allocation11 + $0x80] sm:$0xff]
        %v1309 = vld [vmem:[#allocation11 + $0x88] sm:$0xff]
        %v1310 = vld [vmem:[#allocation11 + $0x90] sm:$0xff]
        %v1311 = vld [vmem:[#allocation11 + $0x98] sm:$0xff]
        %v1312 = vld [vmem:[#allocation11 + $0xa0] sm:$0xff]
        %v1313 = vld [vmem:[#allocation11 + $0xa8] sm:$0xff]
        %v1314 = vld [vmem:[#allocation11 + $0xb0] sm:$0xff]
        %v1315 = vld [vmem:[#allocation11 + $0xb8] sm:$0xff]
        %v1316 = vld [vmem:[#allocation11 + $0xc0] sm:$0xff]
        %v1317 = vld [vmem:[#allocation11 + $0xc8] sm:$0xff]
        %v1318 = vld [vmem:[#allocation11 + $0xd0] sm:$0xff]
        %v1319 = vld [vmem:[#allocation11 + $0xd8] sm:$0xff]
        %v1320 = vld [vmem:[#allocation11 + $0xe0] sm:$0xff]
        %v1321 = vld [vmem:[#allocation11 + $0xe8] sm:$0xff]
        %v1322 = vld [vmem:[#allocation11 + $0xf0] sm:$0xff]
        %v1323 = vld [vmem:[#allocation11 + $0xf8] sm:$0xff]
        %v1324 = vld [vmem:[#allocation11 + $0x100] sm:$0xff]
        %v1325 = vld [vmem:[#allocation11 + $0x108] sm:$0xff]
        %v1326 = vld [vmem:[#allocation11 + $0x110] sm:$0xff]
        %v1327 = vld [vmem:[#allocation11 + $0x118] sm:$0xff]
        %v1328 = vld [vmem:[#allocation11 + $0x120] sm:$0xff]
        %v1329 = vld [vmem:[#allocation11 + $0x128] sm:$0xff]
        %v1330 = vld [vmem:[#allocation11 + $0x130] sm:$0xff]
        %v1331 = vld [vmem:[#allocation11 + $0x138] sm:$0xff]
        %v1332 = vld [vmem:[#allocation11 + $0x140] sm:$0xff]
        %v1333 = vld [vmem:[#allocation11 + $0x148] sm:$0xff]
        %v1334 = vld [vmem:[#allocation11 + $0x150] sm:$0xff]
        %v1335 = vld [vmem:[#allocation11 + $0x158] sm:$0xff]
        %v1336 = vld [vmem:[#allocation11 + $0x160] sm:$0xff]
        %v1337 = vld [vmem:[#allocation11 + $0x168] sm:$0xff]
        %v1338 = vld [vmem:[#allocation11 + $0x170] sm:$0xff]
        %v1339 = vld [vmem:[#allocation11 + $0x178] sm:$0xff]
        %v1340 = vld [vmem:[#allocation11 + $0x180] sm:$0xff]
        %v1341 = vld [vmem:[#allocation11 + $0x188] sm:$0xff]
        %v1342 = vld [vmem:[#allocation11 + $0x190] sm:$0xff]
        %v1343 = vld [vmem:[#allocation11 + $0x198] sm:$0xff]
        %v1344 = vld [vmem:[#allocation11 + $0x1a0] sm:$0xff]
        %v1345 = vld [vmem:[#allocation11 + $0x1a8] sm:$0xff]
        %v1346 = vld [vmem:[#allocation11 + $0x1b0] sm:$0xff]
        %v1347 = vld [vmem:[#allocation11 + $0x1b8] sm:$0xff]
        %v1348 = vld [vmem:[#allocation11 + $0x1c0] sm:$0xff]
        %v1349 = vld [vmem:[#allocation11 + $0x1c8] sm:$0xff]
        %v1350 = vld [vmem:[#allocation11 + $0x1d0] sm:$0xff]
        %v1351 = vld [vmem:[#allocation11 + $0x1d8] sm:$0xff]
        %v1352 = vld [vmem:[#allocation11 + $0x1e0] sm:$0xff]
        %v1353 = vld [vmem:[#allocation11 + $0x1e8] sm:$0xff]
        %v1354 = vld [vmem:[#allocation11 + $0x1f0] sm:$0xff]
        %v1355 = vld [vmem:[#allocation11 + $0x1f8] sm:$0xff]
        %v1356 = vld [vmem:[#allocation11 + $0x200] sm:$0xff]
        %v1357 = vld [vmem:[#allocation11 + $0x208] sm:$0xff]
        %v1358 = vld [vmem:[#allocation11 + $0x210] sm:$0xff]
        %v1359 = vld [vmem:[#allocation11 + $0x218] sm:$0xff]
        %v1360 = vld [vmem:[#allocation11 + $0x220] sm:$0xff]
        %v1361 = vld [vmem:[#allocation11 + $0x228] sm:$0xff]
        %v1362 = vld [vmem:[#allocation11 + $0x230] sm:$0xff]
        %v1363 = vld [vmem:[#allocation11 + $0x238] sm:$0xff]
        %v1364 = vld [vmem:[#allocation11 + $0x240] sm:$0xff]
        %v1365 = vld [vmem:[#allocation11 + $0x248] sm:$0xff]
        %v1366 = vld [vmem:[#allocation11 + $0x250] sm:$0xff]
        %v1367 = vld [vmem:[#allocation11 + $0x258] sm:$0xff]
        %v1368 = vld [vmem:[#allocation11 + $0x260] sm:$0xff]
        %v1369 = vld [vmem:[#allocation11 + $0x268] sm:$0xff]
        %v1370 = vld [vmem:[#allocation11 + $0x270] sm:$0xff]
        %v1371 = vld [vmem:[#allocation11 + $0x278] sm:$0xff]
        %v1372 = vld [vmem:[#allocation11 + $0x280] sm:$0xff]
        %v1373 = vld [vmem:[#allocation11 + $0x288] sm:$0xff]
        %v1374 = vld [vmem:[#allocation11 + $0x290] sm:$0xff]
        %v1375 = vld [vmem:[#allocation11 + $0x298] sm:$0xff]
        %v1376 = vld [vmem:[#allocation11 + $0x2a0] sm:$0xff]
        %v1377 = vld [vmem:[#allocation11 + $0x2a8] sm:$0xff]
        %v1378 = vld [vmem:[#allocation11 + $0x2b0] sm:$0xff]
        %v1379 = vld [vmem:[#allocation11 + $0x2b8] sm:$0xff]
        %v1380 = vld [vmem:[#allocation11 + $0x2c0] sm:$0xff]
        %v1381 = vld [vmem:[#allocation11 + $0x2c8] sm:$0xff]
        %v1382 = vld [vmem:[#allocation11 + $0x2d0] sm:$0xff]
        %v1383 = vld [vmem:[#allocation11 + $0x2d8] sm:$0xff]
        %v1384 = vld [vmem:[#allocation11 + $0x2e0] sm:$0xff]
        %v1385 = vld [vmem:[#allocation11 + $0x2e8] sm:$0xff]
        %v1386 = vld [vmem:[#allocation11 + $0x2f0] sm:$0xff]
        %v1387 = vld [vmem:[#allocation11 + $0x2f8] sm:$0xff]
        %v1388 = vld [vmem:[#allocation11 + $0x300] sm:$0xff]
        %v1389 = vld [vmem:[#allocation11 + $0x308] sm:$0xff]
        %v1390 = vld [vmem:[#allocation11 + $0x310] sm:$0xff]
        %v1391 = vld [vmem:[#allocation11 + $0x318] sm:$0xff]
        %v1392 = vld [vmem:[#allocation11 + $0x320] sm:$0xff]
        %v1393 = vld [vmem:[#allocation11 + $0x328] sm:$0xff]
        %v1394 = vld [vmem:[#allocation11 + $0x330] sm:$0xff]
        %v1395 = vld [vmem:[#allocation11 + $0x338] sm:$0xff]
        %v1396 = vld [vmem:[#allocation11 + $0x340] sm:$0xff]
        %v1397 = vld [vmem:[#allocation11 + $0x348] sm:$0xff]
        %v1398 = vld [vmem:[#allocation11 + $0x350] sm:$0xff]
        %v1399 = vld [vmem:[#allocation11 + $0x358] sm:$0xff]
        %v1400 = vld [vmem:[#allocation11 + $0x360] sm:$0xff]
        %v1401 = vld [vmem:[#allocation11 + $0x368] sm:$0xff]
        %v1402 = vld [vmem:[#allocation11 + $0x370] sm:$0xff]
        %v1403 = vld [vmem:[#allocation11 + $0x378] sm:$0xff]
        %v1404 = vld [vmem:[#allocation11 + $0x380] sm:$0xff]
        %v1405 = vld [vmem:[#allocation11 + $0x388] sm:$0xff]
        %v1406 = vld [vmem:[#allocation11 + $0x390] sm:$0xff]
        %v1407 = vld [vmem:[#allocation11 + $0x398] sm:$0xff]
        %v1408 = vld [vmem:[#allocation11 + $0x3a0] sm:$0xff]
        %v1409 = vld [vmem:[#allocation11 + $0x3a8] sm:$0xff]
        %v1410 = vld [vmem:[#allocation11 + $0x3b0] sm:$0xff]
        %v1411 = vld [vmem:[#allocation11 + $0x3b8] sm:$0xff]
        %v1412 = vld [vmem:[#allocation11 + $0x3c0] sm:$0xff]
        %v1413 = vld [vmem:[#allocation11 + $0x3c8] sm:$0xff]
        %v1414 = vld [vmem:[#allocation11 + $0x3d0] sm:$0xff]
        %v1415 = vld [vmem:[#allocation11 + $0x3d8] sm:$0xff]
        %v1416 = vld [vmem:[#allocation11 + $0x3e0] sm:$0xff]
        %v1417 = vld [vmem:[#allocation11 + $0x3e8] sm:$0xff]
        %v1418 = vld [vmem:[#allocation11 + $0x3f0] sm:$0xff]
        %v1419 = vld [vmem:[#allocation11 + $0x3f8] sm:$0xff]
        %v1420 = vld [vmem:[#allocation11 + $0x400] sm:$0xff]
        %v1421 = vld [vmem:[#allocation11 + $0x408] sm:$0xff]
        %v1422 = vld [vmem:[#allocation11 + $0x410] sm:$0xff]
        %v1423 = vld [vmem:[#allocation11 + $0x418] sm:$0xff]
        %v1424 = vld [vmem:[#allocation11 + $0x420] sm:$0xff]
        %v1425 = vld [vmem:[#allocation11 + $0x428] sm:$0xff]
        %v1426 = vld [vmem:[#allocation11 + $0x430] sm:$0xff]
        %v1427 = vld [vmem:[#allocation11 + $0x438] sm:$0xff]
        %v1428 = vld [vmem:[#allocation11 + $0x440] sm:$0xff]
        %v1429 = vld [vmem:[#allocation11 + $0x448] sm:$0xff]
        %v1430 = vld [vmem:[#allocation11 + $0x450] sm:$0xff]
        %v1431 = vld [vmem:[#allocation11 + $0x458] sm:$0xff]
        %v1432 = vld [vmem:[#allocation11 + $0x460] sm:$0xff]
        %v1433 = vld [vmem:[#allocation11 + $0x468] sm:$0xff]
        %v1434 = vld [vmem:[#allocation11 + $0x470] sm:$0xff]
        %v1435 = vld [vmem:[#allocation11 + $0x478] sm:$0xff]
        %v1436 = vld [vmem:[#allocation11 + $0x480] sm:$0xff]
        %v1437 = vld [vmem:[#allocation11 + $0x488] sm:$0xff]
        %v1438 = vld [vmem:[#allocation11 + $0x490] sm:$0xff]
        %v1439 = vld [vmem:[#allocation11 + $0x498] sm:$0xff]
        %v1440 = vld [vmem:[#allocation11 + $0x4a0] sm:$0xff]
        %v1441 = vld [vmem:[#allocation11 + $0x4a8] sm:$0xff]
        %v1442 = vld [vmem:[#allocation11 + $0x4b0] sm:$0xff]
        %v1443 = vld [vmem:[#allocation11 + $0x4b8] sm:$0xff]
        %v1444 = vld [vmem:[#allocation11 + $0x4c0] sm:$0xff]
        %v1445 = vld [vmem:[#allocation11 + $0x4c8] sm:$0xff]
        %v1446 = vld [vmem:[#allocation11 + $0x4d0] sm:$0xff]
        %v1447 = vld [vmem:[#allocation11 + $0x4d8] sm:$0xff]
        %v1448 = vld [vmem:[#allocation11 + $0x4e0] sm:$0xff]
        %v1449 = vld [vmem:[#allocation11 + $0x4e8] sm:$0xff]
        %v1450 = vld [vmem:[#allocation11 + $0x4f0] sm:$0xff]
        %v1451 = vld [vmem:[#allocation11 + $0x4f8] sm:$0xff]
        %v1452 = vld [vmem:[#allocation11 + $0x500] sm:$0xff]
        %v1453 = vld [vmem:[#allocation11 + $0x508] sm:$0xff]
        %v1454 = vld [vmem:[#allocation11 + $0x510] sm:$0xff]
        %v1455 = vld [vmem:[#allocation11 + $0x518] sm:$0xff]
        %v1456 = vld [vmem:[#allocation11 + $0x520] sm:$0xff]
        %v1457 = vld [vmem:[#allocation11 + $0x528] sm:$0xff]
        %v1458 = vld [vmem:[#allocation11 + $0x530] sm:$0xff]
        %v1459 = vld [vmem:[#allocation11 + $0x538] sm:$0xff]
        %v1460 = vld [vmem:[#allocation11 + $0x540] sm:$0xff]
        %v1461 = vld [vmem:[#allocation11 + $0x548] sm:$0xff]
        %v1462 = vld [vmem:[#allocation11 + $0x550] sm:$0xff]
        %v1463 = vld [vmem:[#allocation11 + $0x558] sm:$0xff]
        %v1464 = vld [vmem:[#allocation11 + $0x560] sm:$0xff]
        %v1465 = vld [vmem:[#allocation11 + $0x568] sm:$0xff]
        %v1466 = vld [vmem:[#allocation11 + $0x570] sm:$0xff]
        %v1467 = vld [vmem:[#allocation11 + $0x578] sm:$0xff]
        %v1468 = vld [vmem:[#allocation11 + $0x580] sm:$0xff]
        %v1469 = vld [vmem:[#allocation11 + $0x588] sm:$0xff]
        %v1470 = vld [vmem:[#allocation11 + $0x590] sm:$0xff]
        %v1471 = vld [vmem:[#allocation11 + $0x598] sm:$0xff]
        %v1472 = vld [vmem:[#allocation11 + $0x5a0] sm:$0xff]
        %v1473 = vld [vmem:[#allocation11 + $0x5a8] sm:$0xff]
        %v1474 = vld [vmem:[#allocation11 + $0x5b0] sm:$0xff]
        %v1475 = vld [vmem:[#allocation11 + $0x5b8] sm:$0xff]
        %v1476 = vld [vmem:[#allocation11 + $0x5c0] sm:$0xff]
        %v1477 = vld [vmem:[#allocation11 + $0x5c8] sm:$0xff]
        %v1478 = vld [vmem:[#allocation11 + $0x5d0] sm:$0xff]
        %v1479 = vld [vmem:[#allocation11 + $0x5d8] sm:$0xff]
        %v1480 = vld [vmem:[#allocation11 + $0x5e0] sm:$0xff]
        %v1481 = vld [vmem:[#allocation11 + $0x5e8] sm:$0xff]
        %v1482 = vld [vmem:[#allocation11 + $0x5f0] sm:$0xff]
        %v1483 = vld [vmem:[#allocation11 + $0x5f8] sm:$0xff]
        %v1484 = vld [vmem:[#allocation11 + $0x600] sm:$0xff]
        %v1485 = vld [vmem:[#allocation11 + $0x608] sm:$0xff]
        %v1486 = vld [vmem:[#allocation11 + $0x610] sm:$0xff]
        %v1487 = vld [vmem:[#allocation11 + $0x618] sm:$0xff]
        %v1488 = vld [vmem:[#allocation11 + $0x620] sm:$0xff]
        %v1489 = vld [vmem:[#allocation11 + $0x628] sm:$0xff]
        %v1490 = vld [vmem:[#allocation11 + $0x630] sm:$0xff]
        %v1491 = vld [vmem:[#allocation11 + $0x638] sm:$0xff]
        %v1492 = vld [vmem:[#allocation11 + $0x640] sm:$0xff]
        %v1493 = vld [vmem:[#allocation11 + $0x648] sm:$0xff]
        %v1494 = vld [vmem:[#allocation11 + $0x650] sm:$0xff]
        %v1495 = vld [vmem:[#allocation11 + $0x658] sm:$0xff]
        %v1496 = vld [vmem:[#allocation11 + $0x660] sm:$0xff]
        %v1497 = vld [vmem:[#allocation11 + $0x668] sm:$0xff]
        %v1498 = vld [vmem:[#allocation11 + $0x670] sm:$0xff]
        %v1499 = vld [vmem:[#allocation11 + $0x678] sm:$0xff]
        %v1500 = vld [vmem:[#allocation11 + $0x680] sm:$0xff]
        %v1501 = vld [vmem:[#allocation11 + $0x688] sm:$0xff]
        %v1502 = vld [vmem:[#allocation11 + $0x690] sm:$0xff]
        %v1503 = vld [vmem:[#allocation11 + $0x698] sm:$0xff]
        %v1504 = vld [vmem:[#allocation11 + $0x6a0] sm:$0xff]
        %v1505 = vld [vmem:[#allocation11 + $0x6a8] sm:$0xff]
        %v1506 = vld [vmem:[#allocation11 + $0x6b0] sm:$0xff]
        %v1507 = vld [vmem:[#allocation11 + $0x6b8] sm:$0xff]
        %v1508 = vld [vmem:[#allocation11 + $0x6c0] sm:$0xff]
        %v1509 = vld [vmem:[#allocation11 + $0x6c8] sm:$0xff]
        %v1510 = vld [vmem:[#allocation11 + $0x6d0] sm:$0xff]
        %v1511 = vld [vmem:[#allocation11 + $0x6d8] sm:$0xff]
        %v1512 = vld [vmem:[#allocation11 + $0x6e0] sm:$0xff]
        %v1513 = vld [vmem:[#allocation11 + $0x6e8] sm:$0xff]
        %v1514 = vld [vmem:[#allocation11 + $0x6f0] sm:$0xff]
        %v1515 = vld [vmem:[#allocation11 + $0x6f8] sm:$0xff]
        %v1516 = vld [vmem:[#allocation11 + $0x700] sm:$0xff]
        %v1517 = vld [vmem:[#allocation11 + $0x708] sm:$0xff]
        %v1518 = vld [vmem:[#allocation11 + $0x710] sm:$0xff]
        %v1519 = vld [vmem:[#allocation11 + $0x718] sm:$0xff]
        %v1520 = vld [vmem:[#allocation11 + $0x720] sm:$0xff]
        %v1521 = vld [vmem:[#allocation11 + $0x728] sm:$0xff]
        %v1522 = vld [vmem:[#allocation11 + $0x730] sm:$0xff]
        %v1523 = vld [vmem:[#allocation11 + $0x738] sm:$0xff]
        %v1524 = vld [vmem:[#allocation11 + $0x740] sm:$0xff]
        %v1525 = vld [vmem:[#allocation11 + $0x748] sm:$0xff]
        %v1526 = vld [vmem:[#allocation11 + $0x750] sm:$0xff]
        %v1527 = vld [vmem:[#allocation11 + $0x758] sm:$0xff]
        %v1528 = vld [vmem:[#allocation11 + $0x760] sm:$0xff]
        %v1529 = vld [vmem:[#allocation11 + $0x768] sm:$0xff]
        %v1530 = vld [vmem:[#allocation11 + $0x770] sm:$0xff]
        %v1531 = vld [vmem:[#allocation11 + $0x778] sm:$0xff]
        %v1532 = vld [vmem:[#allocation11 + $0x780] sm:$0xff]
        %v1533 = vld [vmem:[#allocation11 + $0x788] sm:$0xff]
        %v1534 = vld [vmem:[#allocation11 + $0x790] sm:$0xff]
        %v1535 = vld [vmem:[#allocation11 + $0x798] sm:$0xff]
        %v1536 = vld [vmem:[#allocation11 + $0x7a0] sm:$0xff]
        %v1537 = vld [vmem:[#allocation11 + $0x7a8] sm:$0xff]
        %v1538 = vld [vmem:[#allocation11 + $0x7b0] sm:$0xff]
        %v1539 = vld [vmem:[#allocation11 + $0x7b8] sm:$0xff]
        %v1540 = vld [vmem:[#allocation11 + $0x7c0] sm:$0xff]
        %v1541 = vld [vmem:[#allocation11 + $0x7c8] sm:$0xff]
        %v1542 = vld [vmem:[#allocation11 + $0x7d0] sm:$0xff]
        %v1543 = vld [vmem:[#allocation11 + $0x7d8] sm:$0xff]
        %v1544 = vld [vmem:[#allocation11 + $0x7e0] sm:$0xff]
        %v1545 = vld [vmem:[#allocation11 + $0x7e8] sm:$0xff]
        %v1546 = vld [vmem:[#allocation11 + $0x7f0] sm:$0xff]
        %v1547 = vld [vmem:[#allocation11 + $0x7f8] sm:$0xff]
        %v1548 = vld [vmem:[#allocation11 + $0x800] sm:$0xff]
        %v1549 = vld [vmem:[#allocation11 + $0x808] sm:$0xff]
        %v1550 = vld [vmem:[#allocation11 + $0x810] sm:$0xff]
        %v1551 = vld [vmem:[#allocation11 + $0x818] sm:$0xff]
        %v1552 = vld [vmem:[#allocation11 + $0x820] sm:$0xff]
        %v1553 = vld [vmem:[#allocation11 + $0x828] sm:$0xff]
        %v1554 = vld [vmem:[#allocation11 + $0x830] sm:$0xff]
        %v1555 = vld [vmem:[#allocation11 + $0x838] sm:$0xff]
        %v1556 = vld [vmem:[#allocation11 + $0x840] sm:$0xff]
        %v1557 = vld [vmem:[#allocation11 + $0x848] sm:$0xff]
        %v1558 = vld [vmem:[#allocation11 + $0x850] sm:$0xff]
        %v1559 = vld [vmem:[#allocation11 + $0x858] sm:$0xff]
        %v1560 = vld [vmem:[#allocation11 + $0x860] sm:$0xff]
        %v1561 = vld [vmem:[#allocation11 + $0x868] sm:$0xff]
        %v1562 = vld [vmem:[#allocation11 + $0x870] sm:$0xff]
        %v1563 = vld [vmem:[#allocation11 + $0x878] sm:$0xff]
        %v1564 = vld [vmem:[#allocation13] sm:$0x1]
        %v1568 = vrot.slane 0.0, 1
        %v1569 = vrot.slane %v693, 1
        %v1570 = vsel %vm854, %v1568, %v1569
        %v1571 = vrot.slane %v695, 1
        %v1572 = vsel %vm854, %v1569, %v1571
        %v1575 = vrot.slane 0.0, 2
        %v1576 = vrot.slane %v693, 2
        %v1577 = vsel %vm862, %v1575, %v1576
        %v1578 = vrot.slane %v695, 2
        %v1579 = vsel %vm862, %v1576, %v1578
        %v1582 = vrot.slane 0.0, 3
        %v1583 = vrot.slane %v693, 3
        %v1584 = vsel %vm870, %v1582, %v1583
        %v1585 = vrot.slane %v695, 3
        %v1586 = vsel %vm870, %v1583, %v1585
        %v1589 = vrot.slane 0.0, 4
        %v1590 = vrot.slane %v693, 4
        %v1591 = vsel %vm843, %v1589, %v1590
        %v1592 = vrot.slane %v695, 4
        %v1593 = vsel %vm843, %v1590, %v1592
        %v1596 = vrot.slane 0.0, 5
        %v1597 = vrot.slane %v693, 5
        %v1598 = vsel %vm885, %v1596, %v1597
        %v1599 = vrot.slane %v695, 5
        %v1600 = vsel %vm885, %v1597, %v1599
        %v1603 = vrot.slane 0.0, 6
        %v1604 = vrot.slane %v693, 6
        %v1605 = vsel %vm893, %v1603, %v1604
        %v1606 = vrot.slane %v695, 6
        %v1607 = vsel %vm893, %v1604, %v1606
        %v1610 = vrot.slane 0.0, 7
        %v1611 = vrot.slane %v693, 7
        %v1612 = vsel %vm901, %v1610, %v1611
        %v1613 = vrot.slane %v695, 7
        %v1614 = vsel %vm901, %v1611, %v1613
        %v1617 = vsel %vm854, %v1571, %v1568
        %v1619 = vsel %vm862, %v1578, %v1575
        %v1621 = vsel %vm870, %v1585, %v1582
        %v1623 = vsel %vm843, %v1592, %v1589
        %v1625 = vsel %vm885, %v1599, %v1596
        %v1627 = vsel %vm893, %v1606, %v1603
        %v1629 = vsel %vm901, %v1613, %v1610
        %v1632 = vlaneseq
        %v1633 = vshrl.u32 %v1632, 7
        %v1634 = vsub.s32 0, %v1633
        %v1635 = vrot.slane %v1564, %v1634
        %1637 = vmatprep.subr.mxu0 0.0
        %1638 = vmatpush1.msra.mxu0 %v1307
        %1639 = vmatprep.subr.mxu0 0.0
        %1640 = vmatpush1.msra.mxu0 %v1306
        %1641 = vmatprep.subr.mxu0 0.0
        %1642 = vmatpush1.msra.mxu0 %v1305
        %1643 = vmatprep.subr.mxu0 0.0
        %1644 = vmatpush1.msra.mxu0 %v1304
        %1645 = vmatprep.subr.mxu0 0.0
        %1646 = vmatpush1.msra.mxu0 %v1303
        %1647 = vmatprep.subr.mxu0 0.0
        %1648 = vmatpush1.msra.mxu0 %v1302
        %1649 = vmatprep.subr.mxu0 0.0
        %1650 = vmatpush1.msra.mxu0 %v1301
        %1651 = vmatprep.subr.mxu0 0.0
        %1652 = vmatpush1.msra.mxu0 %v1300
        %1653 = vmatprep.subr.mxu0 0.0
        %1654 = vmatpush1.msra.mxu0 %v1299
        %1655 = vmatprep.subr.mxu0 0.0
        %1656 = vmatpush1.msra.mxu0 %v1298
        %1657 = vmatprep.subr.mxu0 0.0
        %1658 = vmatpush1.msra.mxu0 %v1297
        %1659 = vmatprep.subr.mxu0 0.0
        %1660 = vmatpush1.msra.mxu0 %v1296
        %1661 = vmatprep.subr.mxu0 0.0
        %1662 = vmatpush1.msra.mxu0 %v1295
        %1663 = vmatprep.subr.mxu0 0.0
        %1664 = vmatpush1.msra.mxu0 %v1294
        %1665 = vmatprep.subr.mxu0 0.0
        %1666 = vmatpush1.msra.mxu0 %v1293
        %1667 = vmatprep.subr.mxu0 0.0
        %1668 = vmatpush1.msra.mxu0 %v1292
        %1669 = vmatprep.subr.mxu0 0.0
        %1670 = vmatpush2.msra.mxu0 %v1323
        %1671 = vmatprep.subr.mxu0 0.0
        %1672 = vmatpush2.msra.mxu0 %v1322
        %1673 = vmatprep.subr.mxu0 0.0
        %1674 = vmatpush2.msra.mxu0 %v1321
        %1675 = vmatprep.subr.mxu0 0.0
        %1676 = vmatpush2.msra.mxu0 %v1320
        %1677 = vmatprep.subr.mxu0 0.0
        %1678 = vmatpush2.msra.mxu0 %v1319
        %1679 = vmatprep.subr.mxu0 0.0
        %1680 = vmatpush2.msra.mxu0 %v1318
        %1681 = vmatprep.subr.mxu0 0.0
        %1682 = vmatpush2.msra.mxu0 %v1317
        %1683 = vmatprep.subr.mxu0 0.0
        %1684 = vmatpush2.msra.mxu0 %v1316
        %1685 = vmatprep.subr.mxu0 0.0
        %1686 = vmatpush2.msra.mxu0 %v1315
        %1687 = vmatprep.subr.mxu0 0.0
        %1688 = vmatpush2.msra.mxu0 %v1314
        %1689 = vmatprep.subr.mxu0 0.0
        %1690 = vmatpush2.msra.mxu0 %v1313
        %1691 = vmatprep.subr.mxu0 0.0
        %1692 = vmatpush2.msra.mxu0 %v1312
        %1693 = vmatprep.subr.mxu0 0.0
        %1694 = vmatpush2.msra.mxu0 %v1311
        %1695 = vmatprep.subr.mxu0 0.0
        %1696 = vmatpush2.msra.mxu0 %v1310
        %1697 = vmatprep.subr.mxu0 0.0
        %1698 = vmatpush2.msra.mxu0 %v1309
        %1699 = vmatprep.subr.mxu0 0.0
        %1700 = vmatpush2.msra.mxu0 %v1308
        %1701 = vmatprep.mubr.f32.mxu0 %v1570
        %1702 = vmatmul.mubr.f32.gmra.mxu0 0.0
        %v1703 = vpop.f32.mrf.mxu0
        %v1704 = vadd.f32 %v1635, %v1703
        %v1705 = vpop.f32.mrf.mxu0
        %1706 = vmatprep.mubr.f32.mxu0 %v1572
        %1707 = vmatmul.mubr.f32.gmra.mxu0 %v693
        %v1708 = vpop.f32.mrf.mxu0
        %v1709 = vadd.f32 %v1635, %v1708
        %v1710 = vpop.f32.mrf.mxu0
        %1711 = vdwg.mxu0
        %1712 = vmatprep.subr.mxu0 0.0
        %1713 = vmatpush1.msra.mxu0 %v1339
        %1714 = vmatprep.subr.mxu0 0.0
        %1715 = vmatpush1.msra.mxu0 %v1338
        %1716 = vmatprep.subr.mxu0 0.0
        %1717 = vmatpush1.msra.mxu0 %v1337
        %1718 = vmatprep.subr.mxu0 0.0
        %1719 = vmatpush1.msra.mxu0 %v1336
        %1720 = vmatprep.subr.mxu0 0.0
        %1721 = vmatpush1.msra.mxu0 %v1335
        %1722 = vmatprep.subr.mxu0 0.0
        %1723 = vmatpush1.msra.mxu0 %v1334
        %1724 = vmatprep.subr.mxu0 0.0
        %1725 = vmatpush1.msra.mxu0 %v1333
        %1726 = vmatprep.subr.mxu0 0.0
        %1727 = vmatpush1.msra.mxu0 %v1332
        %1728 = vmatprep.subr.mxu0 0.0
        %1729 = vmatpush1.msra.mxu0 %v1331
        %1730 = vmatprep.subr.mxu0 0.0
        %1731 = vmatpush1.msra.mxu0 %v1330
        %1732 = vmatprep.subr.mxu0 0.0
        %1733 = vmatpush1.msra.mxu0 %v1329
        %1734 = vmatprep.subr.mxu0 0.0
        %1735 = vmatpush1.msra.mxu0 %v1328
        %1736 = vmatprep.subr.mxu0 0.0
        %1737 = vmatpush1.msra.mxu0 %v1327
        %1738 = vmatprep.subr.mxu0 0.0
        %1739 = vmatpush1.msra.mxu0 %v1326
        %1740 = vmatprep.subr.mxu0 0.0
        %1741 = vmatpush1.msra.mxu0 %v1325
        %1742 = vmatprep.subr.mxu0 0.0
        %1743 = vmatpush1.msra.mxu0 %v1324
        %1744 = vmatprep.subr.mxu0 0.0
        %1745 = vmatpush2.msra.mxu0 %v1355
        %1746 = vmatprep.subr.mxu0 0.0
        %1747 = vmatpush2.msra.mxu0 %v1354
        %1748 = vmatprep.subr.mxu0 0.0
        %1749 = vmatpush2.msra.mxu0 %v1353
        %1750 = vmatprep.subr.mxu0 0.0
        %1751 = vmatpush2.msra.mxu0 %v1352
        %1752 = vmatprep.subr.mxu0 0.0
        %1753 = vmatpush2.msra.mxu0 %v1351
        %1754 = vmatprep.subr.mxu0 0.0
        %1755 = vmatpush2.msra.mxu0 %v1350
        %1756 = vmatprep.subr.mxu0 0.0
        %1757 = vmatpush2.msra.mxu0 %v1349
        %1758 = vmatprep.subr.mxu0 0.0
        %1759 = vmatpush2.msra.mxu0 %v1348
        %1760 = vmatprep.subr.mxu0 0.0
        %1761 = vmatpush2.msra.mxu0 %v1347
        %1762 = vmatprep.subr.mxu0 0.0
        %1763 = vmatpush2.msra.mxu0 %v1346
        %1764 = vmatprep.subr.mxu0 0.0
        %1765 = vmatpush2.msra.mxu0 %v1345
        %1766 = vmatprep.subr.mxu0 0.0
        %1767 = vmatpush2.msra.mxu0 %v1344
        %1768 = vmatprep.subr.mxu0 0.0
        %1769 = vmatpush2.msra.mxu0 %v1343
        %1770 = vmatprep.subr.mxu0 0.0
        %1771 = vmatpush2.msra.mxu0 %v1342
        %1772 = vmatprep.subr.mxu0 0.0
        %1773 = vmatpush2.msra.mxu0 %v1341
        %1774 = vmatprep.subr.mxu0 0.0
        %1775 = vmatpush2.msra.mxu0 %v1340
        %1776 = vmatprep.mubr.f32.mxu0 %v1584
        %1777 = vmatmul.mubr.f32.gmra.mxu0 %v1577
        %v1778 = vpop.f32.mrf.mxu0
        %v1779 = vadd.f32 %v1704, %v1778
        %v1780 = vpop.f32.mrf.mxu0
        %1781 = vmatprep.mubr.f32.mxu0 %v1586
        %1782 = vmatmul.mubr.f32.gmra.mxu0 %v1579
        %v1783 = vpop.f32.mrf.mxu0
        %v1784 = vadd.f32 %v1709, %v1783
        %v1785 = vpop.f32.mrf.mxu0
        %1786 = vdwg.mxu0
        %1787 = vmatprep.subr.mxu0 0.0
        %1788 = vmatpush1.msra.mxu0 %v1371
        %1789 = vmatprep.subr.mxu0 0.0
        %1790 = vmatpush1.msra.mxu0 %v1370
        %1791 = vmatprep.subr.mxu0 0.0
        %1792 = vmatpush1.msra.mxu0 %v1369
        %1793 = vmatprep.subr.mxu0 0.0
        %1794 = vmatpush1.msra.mxu0 %v1368
        %1795 = vmatprep.subr.mxu0 0.0
        %1796 = vmatpush1.msra.mxu0 %v1367
        %1797 = vmatprep.subr.mxu0 0.0
        %1798 = vmatpush1.msra.mxu0 %v1366
        %1799 = vmatprep.subr.mxu0 0.0
        %1800 = vmatpush1.msra.mxu0 %v1365
        %1801 = vmatprep.subr.mxu0 0.0
        %1802 = vmatpush1.msra.mxu0 %v1364
        %1803 = vmatprep.subr.mxu0 0.0
        %1804 = vmatpush1.msra.mxu0 %v1363
        %1805 = vmatprep.subr.mxu0 0.0
        %1806 = vmatpush1.msra.mxu0 %v1362
        %1807 = vmatprep.subr.mxu0 0.0
        %1808 = vmatpush1.msra.mxu0 %v1361
        %1809 = vmatprep.subr.mxu0 0.0
        %1810 = vmatpush1.msra.mxu0 %v1360
        %1811 = vmatprep.subr.mxu0 0.0
        %1812 = vmatpush1.msra.mxu0 %v1359
        %1813 = vmatprep.subr.mxu0 0.0
        %1814 = vmatpush1.msra.mxu0 %v1358
        %1815 = vmatprep.subr.mxu0 0.0
        %1816 = vmatpush1.msra.mxu0 %v1357
        %1817 = vmatprep.subr.mxu0 0.0
        %1818 = vmatpush1.msra.mxu0 %v1356
        %1819 = vmatprep.subr.mxu0 0.0
        %1820 = vmatpush2.msra.mxu0 %v1387
        %1821 = vmatprep.subr.mxu0 0.0
        %1822 = vmatpush2.msra.mxu0 %v1386
        %1823 = vmatprep.subr.mxu0 0.0
        %1824 = vmatpush2.msra.mxu0 %v1385
        %1825 = vmatprep.subr.mxu0 0.0
        %1826 = vmatpush2.msra.mxu0 %v1384
        %1827 = vmatprep.subr.mxu0 0.0
        %1828 = vmatpush2.msra.mxu0 %v1383
        %1829 = vmatprep.subr.mxu0 0.0
        %1830 = vmatpush2.msra.mxu0 %v1382
        %1831 = vmatprep.subr.mxu0 0.0
        %1832 = vmatpush2.msra.mxu0 %v1381
        %1833 = vmatprep.subr.mxu0 0.0
        %1834 = vmatpush2.msra.mxu0 %v1380
        %1835 = vmatprep.subr.mxu0 0.0
        %1836 = vmatpush2.msra.mxu0 %v1379
        %1837 = vmatprep.subr.mxu0 0.0
        %1838 = vmatpush2.msra.mxu0 %v1378
        %1839 = vmatprep.subr.mxu0 0.0
        %1840 = vmatpush2.msra.mxu0 %v1377
        %1841 = vmatprep.subr.mxu0 0.0
        %1842 = vmatpush2.msra.mxu0 %v1376
        %1843 = vmatprep.subr.mxu0 0.0
        %1844 = vmatpush2.msra.mxu0 %v1375
        %1845 = vmatprep.subr.mxu0 0.0
        %1846 = vmatpush2.msra.mxu0 %v1374
        %1847 = vmatprep.subr.mxu0 0.0
        %1848 = vmatpush2.msra.mxu0 %v1373
        %1849 = vmatprep.subr.mxu0 0.0
        %1850 = vmatpush2.msra.mxu0 %v1372
        %1851 = vmatprep.mubr.f32.mxu0 %v1598
        %1852 = vmatmul.mubr.f32.gmra.mxu0 %v1591
        %v1853 = vpop.f32.mrf.mxu0
        %v1854 = vadd.f32 %v1779, %v1853
        %v1855 = vpop.f32.mrf.mxu0
        %1856 = vmatprep.mubr.f32.mxu0 %v1600
        %1857 = vmatmul.mubr.f32.gmra.mxu0 %v1593
        %v1858 = vpop.f32.mrf.mxu0
        %v1859 = vadd.f32 %v1784, %v1858
        %v1860 = vpop.f32.mrf.mxu0
        %1861 = vdwg.mxu0
        %1862 = vmatprep.subr.mxu0 0.0
        %1863 = vmatpush1.msra.mxu0 %v1403
        %1864 = vmatprep.subr.mxu0 0.0
        %1865 = vmatpush1.msra.mxu0 %v1402
        %1866 = vmatprep.subr.mxu0 0.0
        %1867 = vmatpush1.msra.mxu0 %v1401
        %1868 = vmatprep.subr.mxu0 0.0
        %1869 = vmatpush1.msra.mxu0 %v1400
        %1870 = vmatprep.subr.mxu0 0.0
        %1871 = vmatpush1.msra.mxu0 %v1399
        %1872 = vmatprep.subr.mxu0 0.0
        %1873 = vmatpush1.msra.mxu0 %v1398
        %1874 = vmatprep.subr.mxu0 0.0
        %1875 = vmatpush1.msra.mxu0 %v1397
        %1876 = vmatprep.subr.mxu0 0.0
        %1877 = vmatpush1.msra.mxu0 %v1396
        %1878 = vmatprep.subr.mxu0 0.0
        %1879 = vmatpush1.msra.mxu0 %v1395
        %1880 = vmatprep.subr.mxu0 0.0
        %1881 = vmatpush1.msra.mxu0 %v1394
        %1882 = vmatprep.subr.mxu0 0.0
        %1883 = vmatpush1.msra.mxu0 %v1393
        %1884 = vmatprep.subr.mxu0 0.0
        %1885 = vmatpush1.msra.mxu0 %v1392
        %1886 = vmatprep.subr.mxu0 0.0
        %1887 = vmatpush1.msra.mxu0 %v1391
        %1888 = vmatprep.subr.mxu0 0.0
        %1889 = vmatpush1.msra.mxu0 %v1390
        %1890 = vmatprep.subr.mxu0 0.0
        %1891 = vmatpush1.msra.mxu0 %v1389
        %1892 = vmatprep.subr.mxu0 0.0
        %1893 = vmatpush1.msra.mxu0 %v1388
        %1894 = vmatprep.subr.mxu0 0.0
        %1895 = vmatpush2.msra.mxu0 %v1419
        %1896 = vmatprep.subr.mxu0 0.0
        %1897 = vmatpush2.msra.mxu0 %v1418
        %1898 = vmatprep.subr.mxu0 0.0
        %1899 = vmatpush2.msra.mxu0 %v1417
        %1900 = vmatprep.subr.mxu0 0.0
        %1901 = vmatpush2.msra.mxu0 %v1416
        %1902 = vmatprep.subr.mxu0 0.0
        %1903 = vmatpush2.msra.mxu0 %v1415
        %1904 = vmatprep.subr.mxu0 0.0
        %1905 = vmatpush2.msra.mxu0 %v1414
        %1906 = vmatprep.subr.mxu0 0.0
        %1907 = vmatpush2.msra.mxu0 %v1413
        %1908 = vmatprep.subr.mxu0 0.0
        %1909 = vmatpush2.msra.mxu0 %v1412
        %1910 = vmatprep.subr.mxu0 0.0
        %1911 = vmatpush2.msra.mxu0 %v1411
        %1912 = vmatprep.subr.mxu0 0.0
        %1913 = vmatpush2.msra.mxu0 %v1410
        %1914 = vmatprep.subr.mxu0 0.0
        %1915 = vmatpush2.msra.mxu0 %v1409
        %1916 = vmatprep.subr.mxu0 0.0
        %1917 = vmatpush2.msra.mxu0 %v1408
        %1918 = vmatprep.subr.mxu0 0.0
        %1919 = vmatpush2.msra.mxu0 %v1407
        %1920 = vmatprep.subr.mxu0 0.0
        %1921 = vmatpush2.msra.mxu0 %v1406
        %1922 = vmatprep.subr.mxu0 0.0
        %1923 = vmatpush2.msra.mxu0 %v1405
        %1924 = vmatprep.subr.mxu0 0.0
        %1925 = vmatpush2.msra.mxu0 %v1404
        %1926 = vmatprep.mubr.f32.mxu0 %v1612
        %1927 = vmatmul.mubr.f32.gmra.mxu0 %v1605
        %v1928 = vpop.f32.mrf.mxu0
        %v1929 = vadd.f32 %v1854, %v1928
        %v1930 = vpop.f32.mrf.mxu0
        %1931 = vmatprep.mubr.f32.mxu0 %v1614
        %1932 = vmatmul.mubr.f32.gmra.mxu0 %v1607
        %v1933 = vpop.f32.mrf.mxu0
        %v1934 = vadd.f32 %v1859, %v1933
        %v1935 = vpop.f32.mrf.mxu0
        %1936 = vdwg.mxu0
        %1937 = vmatprep.subr.mxu0 0.0
        %1938 = vmatpush1.msra.mxu0 %v1435
        %1939 = vmatprep.subr.mxu0 0.0
        %1940 = vmatpush1.msra.mxu0 %v1434
        %1941 = vmatprep.subr.mxu0 0.0
        %1942 = vmatpush1.msra.mxu0 %v1433
        %1943 = vmatprep.subr.mxu0 0.0
        %1944 = vmatpush1.msra.mxu0 %v1432
        %1945 = vmatprep.subr.mxu0 0.0
        %1946 = vmatpush1.msra.mxu0 %v1431
        %1947 = vmatprep.subr.mxu0 0.0
        %1948 = vmatpush1.msra.mxu0 %v1430
        %1949 = vmatprep.subr.mxu0 0.0
        %1950 = vmatpush1.msra.mxu0 %v1429
        %1951 = vmatprep.subr.mxu0 0.0
        %1952 = vmatpush1.msra.mxu0 %v1428
        %1953 = vmatprep.subr.mxu0 0.0
        %1954 = vmatpush1.msra.mxu0 %v1427
        %1955 = vmatprep.subr.mxu0 0.0
        %1956 = vmatpush1.msra.mxu0 %v1426
        %1957 = vmatprep.subr.mxu0 0.0
        %1958 = vmatpush1.msra.mxu0 %v1425
        %1959 = vmatprep.subr.mxu0 0.0
        %1960 = vmatpush1.msra.mxu0 %v1424
        %1961 = vmatprep.subr.mxu0 0.0
        %1962 = vmatpush1.msra.mxu0 %v1423
        %1963 = vmatprep.subr.mxu0 0.0
        %1964 = vmatpush1.msra.mxu0 %v1422
        %1965 = vmatprep.subr.mxu0 0.0
        %1966 = vmatpush1.msra.mxu0 %v1421
        %1967 = vmatprep.subr.mxu0 0.0
        %1968 = vmatpush1.msra.mxu0 %v1420
        %1969 = vmatprep.subr.mxu0 0.0
        %1970 = vmatpush2.msra.mxu0 %v1451
        %1971 = vmatprep.subr.mxu0 0.0
        %1972 = vmatpush2.msra.mxu0 %v1450
        %1973 = vmatprep.subr.mxu0 0.0
        %1974 = vmatpush2.msra.mxu0 %v1449
        %1975 = vmatprep.subr.mxu0 0.0
        %1976 = vmatpush2.msra.mxu0 %v1448
        %1977 = vmatprep.subr.mxu0 0.0
        %1978 = vmatpush2.msra.mxu0 %v1447
        %1979 = vmatprep.subr.mxu0 0.0
        %1980 = vmatpush2.msra.mxu0 %v1446
        %1981 = vmatprep.subr.mxu0 0.0
        %1982 = vmatpush2.msra.mxu0 %v1445
        %1983 = vmatprep.subr.mxu0 0.0
        %1984 = vmatpush2.msra.mxu0 %v1444
        %1985 = vmatprep.subr.mxu0 0.0
        %1986 = vmatpush2.msra.mxu0 %v1443
        %1987 = vmatprep.subr.mxu0 0.0
        %1988 = vmatpush2.msra.mxu0 %v1442
        %1989 = vmatprep.subr.mxu0 0.0
        %1990 = vmatpush2.msra.mxu0 %v1441
        %1991 = vmatprep.subr.mxu0 0.0
        %1992 = vmatpush2.msra.mxu0 %v1440
        %1993 = vmatprep.subr.mxu0 0.0
        %1994 = vmatpush2.msra.mxu0 %v1439
        %1995 = vmatprep.subr.mxu0 0.0
        %1996 = vmatpush2.msra.mxu0 %v1438
        %1997 = vmatprep.subr.mxu0 0.0
        %1998 = vmatpush2.msra.mxu0 %v1437
        %1999 = vmatprep.subr.mxu0 0.0
        %2000 = vmatpush2.msra.mxu0 %v1436
        %2001 = vmatprep.mubr.f32.mxu0 %v1572
        %2002 = vmatmul.mubr.f32.gmra.mxu0 %v693
        %v2003 = vpop.f32.mrf.mxu0
        %v2004 = vadd.f32 %v1929, %v2003
        %v2005 = vpop.f32.mrf.mxu0
        %2006 = vmatprep.mubr.f32.mxu0 %v1617
        %2007 = vmatmul.mubr.f32.gmra.mxu0 %v695
        %v2008 = vpop.f32.mrf.mxu0
        %v2009 = vadd.f32 %v1934, %v2008
        %v2010 = vpop.f32.mrf.mxu0
        %2011 = vdwg.mxu0
        %2012 = vmatprep.subr.mxu0 0.0
        %2013 = vmatpush1.msra.mxu0 %v1467
        %2014 = vmatprep.subr.mxu0 0.0
        %2015 = vmatpush1.msra.mxu0 %v1466
        %2016 = vmatprep.subr.mxu0 0.0
        %2017 = vmatpush1.msra.mxu0 %v1465
        %2018 = vmatprep.subr.mxu0 0.0
        %2019 = vmatpush1.msra.mxu0 %v1464
        %2020 = vmatprep.subr.mxu0 0.0
        %2021 = vmatpush1.msra.mxu0 %v1463
        %2022 = vmatprep.subr.mxu0 0.0
        %2023 = vmatpush1.msra.mxu0 %v1462
        %2024 = vmatprep.subr.mxu0 0.0
        %2025 = vmatpush1.msra.mxu0 %v1461
        %2026 = vmatprep.subr.mxu0 0.0
        %2027 = vmatpush1.msra.mxu0 %v1460
        %2028 = vmatprep.subr.mxu0 0.0
        %2029 = vmatpush1.msra.mxu0 %v1459
        %2030 = vmatprep.subr.mxu0 0.0
        %2031 = vmatpush1.msra.mxu0 %v1458
        %2032 = vmatprep.subr.mxu0 0.0
        %2033 = vmatpush1.msra.mxu0 %v1457
        %2034 = vmatprep.subr.mxu0 0.0
        %2035 = vmatpush1.msra.mxu0 %v1456
        %2036 = vmatprep.subr.mxu0 0.0
        %2037 = vmatpush1.msra.mxu0 %v1455
        %2038 = vmatprep.subr.mxu0 0.0
        %2039 = vmatpush1.msra.mxu0 %v1454
        %2040 = vmatprep.subr.mxu0 0.0
        %2041 = vmatpush1.msra.mxu0 %v1453
        %2042 = vmatprep.subr.mxu0 0.0
        %2043 = vmatpush1.msra.mxu0 %v1452
        %2044 = vmatprep.subr.mxu0 0.0
        %2045 = vmatpush2.msra.mxu0 %v1483
        %2046 = vmatprep.subr.mxu0 0.0
        %2047 = vmatpush2.msra.mxu0 %v1482
        %2048 = vmatprep.subr.mxu0 0.0
        %2049 = vmatpush2.msra.mxu0 %v1481
        %2050 = vmatprep.subr.mxu0 0.0
        %2051 = vmatpush2.msra.mxu0 %v1480
        %2052 = vmatprep.subr.mxu0 0.0
        %2053 = vmatpush2.msra.mxu0 %v1479
        %2054 = vmatprep.subr.mxu0 0.0
        %2055 = vmatpush2.msra.mxu0 %v1478
        %2056 = vmatprep.subr.mxu0 0.0
        %2057 = vmatpush2.msra.mxu0 %v1477
        %2058 = vmatprep.subr.mxu0 0.0
        %2059 = vmatpush2.msra.mxu0 %v1476
        %2060 = vmatprep.subr.mxu0 0.0
        %2061 = vmatpush2.msra.mxu0 %v1475
        %2062 = vmatprep.subr.mxu0 0.0
        %2063 = vmatpush2.msra.mxu0 %v1474
        %2064 = vmatprep.subr.mxu0 0.0
        %2065 = vmatpush2.msra.mxu0 %v1473
        %2066 = vmatprep.subr.mxu0 0.0
        %2067 = vmatpush2.msra.mxu0 %v1472
        %2068 = vmatprep.subr.mxu0 0.0
        %2069 = vmatpush2.msra.mxu0 %v1471
        %2070 = vmatprep.subr.mxu0 0.0
        %2071 = vmatpush2.msra.mxu0 %v1470
        %2072 = vmatprep.subr.mxu0 0.0
        %2073 = vmatpush2.msra.mxu0 %v1469
        %2074 = vmatprep.subr.mxu0 0.0
        %2075 = vmatpush2.msra.mxu0 %v1468
        %2076 = vmatprep.mubr.f32.mxu0 %v1586
        %2077 = vmatmul.mubr.f32.gmra.mxu0 %v1579
        %v2078 = vpop.f32.mrf.mxu0
        %v2079 = vadd.f32 %v2004, %v2078
        %v2080 = vpop.f32.mrf.mxu0
        %2081 = vmatprep.mubr.f32.mxu0 %v1621
        %2082 = vmatmul.mubr.f32.gmra.mxu0 %v1619
        %v2083 = vpop.f32.mrf.mxu0
        %v2084 = vadd.f32 %v2009, %v2083
        %v2085 = vpop.f32.mrf.mxu0
        %2086 = vdwg.mxu0
        %2087 = vmatprep.subr.mxu0 0.0
        %2088 = vmatpush1.msra.mxu0 %v1499
        %2089 = vmatprep.subr.mxu0 0.0
        %2090 = vmatpush1.msra.mxu0 %v1498
        %2091 = vmatprep.subr.mxu0 0.0
        %2092 = vmatpush1.msra.mxu0 %v1497
        %2093 = vmatprep.subr.mxu0 0.0
        %2094 = vmatpush1.msra.mxu0 %v1496
        %2095 = vmatprep.subr.mxu0 0.0
        %2096 = vmatpush1.msra.mxu0 %v1495
        %2097 = vmatprep.subr.mxu0 0.0
        %2098 = vmatpush1.msra.mxu0 %v1494
        %2099 = vmatprep.subr.mxu0 0.0
        %2100 = vmatpush1.msra.mxu0 %v1493
        %2101 = vmatprep.subr.mxu0 0.0
        %2102 = vmatpush1.msra.mxu0 %v1492
        %2103 = vmatprep.subr.mxu0 0.0
        %2104 = vmatpush1.msra.mxu0 %v1491
        %2105 = vmatprep.subr.mxu0 0.0
        %2106 = vmatpush1.msra.mxu0 %v1490
        %2107 = vmatprep.subr.mxu0 0.0
        %2108 = vmatpush1.msra.mxu0 %v1489
        %2109 = vmatprep.subr.mxu0 0.0
        %2110 = vmatpush1.msra.mxu0 %v1488
        %2111 = vmatprep.subr.mxu0 0.0
        %2112 = vmatpush1.msra.mxu0 %v1487
        %2113 = vmatprep.subr.mxu0 0.0
        %2114 = vmatpush1.msra.mxu0 %v1486
        %2115 = vmatprep.subr.mxu0 0.0
        %2116 = vmatpush1.msra.mxu0 %v1485
        %2117 = vmatprep.subr.mxu0 0.0
        %2118 = vmatpush1.msra.mxu0 %v1484
        %2119 = vmatprep.subr.mxu0 0.0
        %2120 = vmatpush2.msra.mxu0 %v1515
        %2121 = vmatprep.subr.mxu0 0.0
        %2122 = vmatpush2.msra.mxu0 %v1514
        %2123 = vmatprep.subr.mxu0 0.0
        %2124 = vmatpush2.msra.mxu0 %v1513
        %2125 = vmatprep.subr.mxu0 0.0
        %2126 = vmatpush2.msra.mxu0 %v1512
        %2127 = vmatprep.subr.mxu0 0.0
        %2128 = vmatpush2.msra.mxu0 %v1511
        %2129 = vmatprep.subr.mxu0 0.0
        %2130 = vmatpush2.msra.mxu0 %v1510
        %2131 = vmatprep.subr.mxu0 0.0
        %2132 = vmatpush2.msra.mxu0 %v1509
        %2133 = vmatprep.subr.mxu0 0.0
        %2134 = vmatpush2.msra.mxu0 %v1508
        %2135 = vmatprep.subr.mxu0 0.0
        %2136 = vmatpush2.msra.mxu0 %v1507
        %2137 = vmatprep.subr.mxu0 0.0
        %2138 = vmatpush2.msra.mxu0 %v1506
        %2139 = vmatprep.subr.mxu0 0.0
        %2140 = vmatpush2.msra.mxu0 %v1505
        %2141 = vmatprep.subr.mxu0 0.0
        %2142 = vmatpush2.msra.mxu0 %v1504
        %2143 = vmatprep.subr.mxu0 0.0
        %2144 = vmatpush2.msra.mxu0 %v1503
        %2145 = vmatprep.subr.mxu0 0.0
        %2146 = vmatpush2.msra.mxu0 %v1502
        %2147 = vmatprep.subr.mxu0 0.0
        %2148 = vmatpush2.msra.mxu0 %v1501
        %2149 = vmatprep.subr.mxu0 0.0
        %2150 = vmatpush2.msra.mxu0 %v1500
        %2151 = vmatprep.mubr.f32.mxu0 %v1600
        %2152 = vmatmul.mubr.f32.gmra.mxu0 %v1593
        %v2153 = vpop.f32.mrf.mxu0
        %v2154 = vadd.f32 %v2079, %v2153
        %v2155 = vpop.f32.mrf.mxu0
        %2156 = vmatprep.mubr.f32.mxu0 %v1625
        %2157 = vmatmul.mubr.f32.gmra.mxu0 %v1623
        %v2158 = vpop.f32.mrf.mxu0
        %v2159 = vadd.f32 %v2084, %v2158
        %v2160 = vpop.f32.mrf.mxu0
        %2161 = vdwg.mxu0
        %2162 = vmatprep.subr.mxu0 0.0
        %2163 = vmatpush1.msra.mxu0 %v1531
        %2164 = vmatprep.subr.mxu0 0.0
        %2165 = vmatpush1.msra.mxu0 %v1530
        %2166 = vmatprep.subr.mxu0 0.0
        %2167 = vmatpush1.msra.mxu0 %v1529
        %2168 = vmatprep.subr.mxu0 0.0
        %2169 = vmatpush1.msra.mxu0 %v1528
        %2170 = vmatprep.subr.mxu0 0.0
        %2171 = vmatpush1.msra.mxu0 %v1527
        %2172 = vmatprep.subr.mxu0 0.0
        %2173 = vmatpush1.msra.mxu0 %v1526
        %2174 = vmatprep.subr.mxu0 0.0
        %2175 = vmatpush1.msra.mxu0 %v1525
        %2176 = vmatprep.subr.mxu0 0.0
        %2177 = vmatpush1.msra.mxu0 %v1524
        %2178 = vmatprep.subr.mxu0 0.0
        %2179 = vmatpush1.msra.mxu0 %v1523
        %2180 = vmatprep.subr.mxu0 0.0
        %2181 = vmatpush1.msra.mxu0 %v1522
        %2182 = vmatprep.subr.mxu0 0.0
        %2183 = vmatpush1.msra.mxu0 %v1521
        %2184 = vmatprep.subr.mxu0 0.0
        %2185 = vmatpush1.msra.mxu0 %v1520
        %2186 = vmatprep.subr.mxu0 0.0
        %2187 = vmatpush1.msra.mxu0 %v1519
        %2188 = vmatprep.subr.mxu0 0.0
        %2189 = vmatpush1.msra.mxu0 %v1518
        %2190 = vmatprep.subr.mxu0 0.0
        %2191 = vmatpush1.msra.mxu0 %v1517
        %2192 = vmatprep.subr.mxu0 0.0
        %2193 = vmatpush1.msra.mxu0 %v1516
        %2194 = vmatprep.subr.mxu0 0.0
        %2195 = vmatpush2.msra.mxu0 %v1547
        %2196 = vmatprep.subr.mxu0 0.0
        %2197 = vmatpush2.msra.mxu0 %v1546
        %2198 = vmatprep.subr.mxu0 0.0
        %2199 = vmatpush2.msra.mxu0 %v1545
        %2200 = vmatprep.subr.mxu0 0.0
        %2201 = vmatpush2.msra.mxu0 %v1544
        %2202 = vmatprep.subr.mxu0 0.0
        %2203 = vmatpush2.msra.mxu0 %v1543
        %2204 = vmatprep.subr.mxu0 0.0
        %2205 = vmatpush2.msra.mxu0 %v1542
        %2206 = vmatprep.subr.mxu0 0.0
        %2207 = vmatpush2.msra.mxu0 %v1541
        %2208 = vmatprep.subr.mxu0 0.0
        %2209 = vmatpush2.msra.mxu0 %v1540
        %2210 = vmatprep.subr.mxu0 0.0
        %2211 = vmatpush2.msra.mxu0 %v1539
        %2212 = vmatprep.subr.mxu0 0.0
        %2213 = vmatpush2.msra.mxu0 %v1538
        %2214 = vmatprep.subr.mxu0 0.0
        %2215 = vmatpush2.msra.mxu0 %v1537
        %2216 = vmatprep.subr.mxu0 0.0
        %2217 = vmatpush2.msra.mxu0 %v1536
        %2218 = vmatprep.subr.mxu0 0.0
        %2219 = vmatpush2.msra.mxu0 %v1535
        %2220 = vmatprep.subr.mxu0 0.0
        %2221 = vmatpush2.msra.mxu0 %v1534
        %2222 = vmatprep.subr.mxu0 0.0
        %2223 = vmatpush2.msra.mxu0 %v1533
        %2224 = vmatprep.subr.mxu0 0.0
        %2225 = vmatpush2.msra.mxu0 %v1532
        %2226 = vmatprep.mubr.f32.mxu0 %v1614
        %2227 = vmatmul.mubr.f32.gmra.mxu0 %v1607
        %v2228 = vpop.f32.mrf.mxu0
        %v2229 = vadd.f32 %v2154, %v2228
        %v2230 = vpop.f32.mrf.mxu0
        %2231 = vmatprep.mubr.f32.mxu0 %v1629
        %2232 = vmatmul.mubr.f32.gmra.mxu0 %v1627
        %v2233 = vpop.f32.mrf.mxu0
        %v2234 = vadd.f32 %v2159, %v2233
        %v2235 = vpop.f32.mrf.mxu0
        %2236 = vdwg.mxu0
        %2237 = vmatprep.subr.mxu0 0.0
        %2238 = vmatpush1.msra.mxu0 %v1563
        %2239 = vmatprep.subr.mxu0 0.0
        %2240 = vmatpush1.msra.mxu0 %v1562
        %2241 = vmatprep.subr.mxu0 0.0
        %2242 = vmatpush1.msra.mxu0 %v1561
        %2243 = vmatprep.subr.mxu0 0.0
        %2244 = vmatpush1.msra.mxu0 %v1560
        %2245 = vmatprep.subr.mxu0 0.0
        %2246 = vmatpush1.msra.mxu0 %v1559
        %2247 = vmatprep.subr.mxu0 0.0
        %2248 = vmatpush1.msra.mxu0 %v1558
        %2249 = vmatprep.subr.mxu0 0.0
        %2250 = vmatpush1.msra.mxu0 %v1557
        %2251 = vmatprep.subr.mxu0 0.0
        %2252 = vmatpush1.msra.mxu0 %v1556
        %2253 = vmatprep.subr.mxu0 0.0
        %2254 = vmatpush1.msra.mxu0 %v1555
        %2255 = vmatprep.subr.mxu0 0.0
        %2256 = vmatpush1.msra.mxu0 %v1554
        %2257 = vmatprep.subr.mxu0 0.0
        %2258 = vmatpush1.msra.mxu0 %v1553
        %2259 = vmatprep.subr.mxu0 0.0
        %2260 = vmatpush1.msra.mxu0 %v1552
        %2261 = vmatprep.subr.mxu0 0.0
        %2262 = vmatpush1.msra.mxu0 %v1551
        %2263 = vmatprep.subr.mxu0 0.0
        %2264 = vmatpush1.msra.mxu0 %v1550
        %2265 = vmatprep.subr.mxu0 0.0
        %2266 = vmatpush1.msra.mxu0 %v1549
        %2267 = vmatprep.subr.mxu0 0.0
        %2268 = vmatpush1.msra.mxu0 %v1548
        %2269 = vmatprep.subr.mxu0 0.0
        %2270 = vmatpush2.msra.mxu0 0.0
        %2271 = vmatprep.subr.mxu0 0.0
        %2272 = vmatpush2.msra.mxu0 0.0
        %2273 = vmatprep.subr.mxu0 0.0
        %2274 = vmatpush2.msra.mxu0 0.0
        %2275 = vmatprep.subr.mxu0 0.0
        %2276 = vmatpush2.msra.mxu0 0.0
        %2277 = vmatprep.subr.mxu0 0.0
        %2278 = vmatpush2.msra.mxu0 0.0
        %2279 = vmatprep.subr.mxu0 0.0
        %2280 = vmatpush2.msra.mxu0 0.0
        %2281 = vmatprep.subr.mxu0 0.0
        %2282 = vmatpush2.msra.mxu0 0.0
        %2283 = vmatprep.subr.mxu0 0.0
        %2284 = vmatpush2.msra.mxu0 0.0
        %2285 = vmatprep.subr.mxu0 0.0
        %2286 = vmatpush2.msra.mxu0 0.0
        %2287 = vmatprep.subr.mxu0 0.0
        %2288 = vmatpush2.msra.mxu0 0.0
        %2289 = vmatprep.subr.mxu0 0.0
        %2290 = vmatpush2.msra.mxu0 0.0
        %2291 = vmatprep.subr.mxu0 0.0
        %2292 = vmatpush2.msra.mxu0 0.0
        %2293 = vmatprep.subr.mxu0 0.0
        %2294 = vmatpush2.msra.mxu0 0.0
        %2295 = vmatprep.subr.mxu0 0.0
        %2296 = vmatpush2.msra.mxu0 0.0
        %2297 = vmatprep.subr.mxu0 0.0
        %2298 = vmatpush2.msra.mxu0 0.0
        %2299 = vmatprep.subr.mxu0 0.0
        %2300 = vmatpush2.msra.mxu0 0.0
        %2301 = vmatprep.mubr.f32.mxu0 0.0
        %2302 = vmatmul.mubr.f32.gmra.mxu0 %v695
        %v2303 = vpop.f32.mrf.mxu0
        %v2304 = vadd.f32 %v2229, %v2303
        %v2305 = vpop.f32.mrf.mxu0
        %2306 = vmatprep.mubr.f32.mxu0 0.0
        %2307 = vmatmul.mubr.f32.gmra.mxu0 0.0
        %v2308 = vpop.f32.mrf.mxu0
        %v2309 = vadd.f32 %v2234, %v2308
        %v2310 = vpop.f32.mrf.mxu0
        %2311 = vdwg.mxu0
        %v2312 = vmax.f32 %v2304, 0.0
        %v2313 = vmax.f32 %v2309, 0.0
        %v2314 = vld [vmem:[#allocation14] sm:$0xff]
        %v2315 = vld [vmem:[#allocation14 + $0x8] sm:$0xff]
        %v2316 = vld [vmem:[#allocation14 + $0x10] sm:$0xff]
        %v2317 = vld [vmem:[#allocation14 + $0x18] sm:$0xff]
        %v2318 = vld [vmem:[#allocation14 + $0x20] sm:$0xff]
        %v2319 = vld [vmem:[#allocation14 + $0x28] sm:$0xff]
        %v2320 = vld [vmem:[#allocation14 + $0x30] sm:$0xff]
        %v2321 = vld [vmem:[#allocation14 + $0x38] sm:$0xff]
        %v2322 = vld [vmem:[#allocation16] sm:$0x1]
        %v2324 = vlaneseq
        %v2325 = vshrl.u32 %v2324, 7
        %v2326 = vsub.s32 0, %v2325
        %v2327 = vrot.slane %v2322, %v2326
        %2329 = vmatprep.subr.mxu0 0.0
        %2330 = vmatpush1.msra.mxu0 0.0
        %2331 = vmatprep.subr.mxu0 0.0
        %2332 = vmatpush1.msra.mxu0 0.0
        %2333 = vmatprep.subr.mxu0 0.0
        %2334 = vmatpush1.msra.mxu0 0.0
        %2335 = vmatprep.subr.mxu0 0.0
        %2336 = vmatpush1.msra.mxu0 0.0
        %2337 = vmatprep.subr.mxu0 0.0
        %2338 = vmatpush1.msra.mxu0 0.0
        %2339 = vmatprep.subr.mxu0 0.0
        %2340 = vmatpush1.msra.mxu0 0.0
        %2341 = vmatprep.subr.mxu0 0.0
        %2342 = vmatpush1.msra.mxu0 0.0
        %2343 = vmatprep.subr.mxu0 0.0
        %2344 = vmatpush1.msra.mxu0 0.0
        %2345 = vmatprep.subr.mxu0 0.0
        %2346 = vmatpush1.msra.mxu0 %v2321
        %2347 = vmatprep.subr.mxu0 0.0
        %2348 = vmatpush1.msra.mxu0 %v2320
        %2349 = vmatprep.subr.mxu0 0.0
        %2350 = vmatpush1.msra.mxu0 %v2319
        %2351 = vmatprep.subr.mxu0 0.0
        %2352 = vmatpush1.msra.mxu0 %v2318
        %2353 = vmatprep.subr.mxu0 0.0
        %2354 = vmatpush1.msra.mxu0 %v2317
        %2355 = vmatprep.subr.mxu0 0.0
        %2356 = vmatpush1.msra.mxu0 %v2316
        %2357 = vmatprep.subr.mxu0 0.0
        %2358 = vmatpush1.msra.mxu0 %v2315
        %2359 = vmatprep.subr.mxu0 0.0
        %2360 = vmatpush1.msra.mxu0 %v2314
        %2361 = vmatprep.subr.mxu0 0.0
        %2362 = vmatpush2.msra.mxu0 0.0
        %2363 = vmatprep.subr.mxu0 0.0
        %2364 = vmatpush2.msra.mxu0 0.0
        %2365 = vmatprep.subr.mxu0 0.0
        %2366 = vmatpush2.msra.mxu0 0.0
        %2367 = vmatprep.subr.mxu0 0.0
        %2368 = vmatpush2.msra.mxu0 0.0
        %2369 = vmatprep.subr.mxu0 0.0
        %2370 = vmatpush2.msra.mxu0 0.0
        %2371 = vmatprep.subr.mxu0 0.0
        %2372 = vmatpush2.msra.mxu0 0.0
        %2373 = vmatprep.subr.mxu0 0.0
        %2374 = vmatpush2.msra.mxu0 0.0
        %2375 = vmatprep.subr.mxu0 0.0
        %2376 = vmatpush2.msra.mxu0 0.0
        %2377 = vmatprep.subr.mxu0 0.0
        %2378 = vmatpush2.msra.mxu0 0.0
        %2379 = vmatprep.subr.mxu0 0.0
        %2380 = vmatpush2.msra.mxu0 0.0
        %2381 = vmatprep.subr.mxu0 0.0
        %2382 = vmatpush2.msra.mxu0 0.0
        %2383 = vmatprep.subr.mxu0 0.0
        %2384 = vmatpush2.msra.mxu0 0.0
        %2385 = vmatprep.subr.mxu0 0.0
        %2386 = vmatpush2.msra.mxu0 0.0
        %2387 = vmatprep.subr.mxu0 0.0
        %2388 = vmatpush2.msra.mxu0 0.0
        %2389 = vmatprep.subr.mxu0 0.0
        %2390 = vmatpush2.msra.mxu0 0.0
        %2391 = vmatprep.subr.mxu0 0.0
        %2392 = vmatpush2.msra.mxu0 0.0
        %2393 = vmatprep.mubr.f32.mxu0 0.0
        %2394 = vmatmul.mubr.f32.gmra.mxu0 %v610
        %v2395 = vpop.f32.mrf.mxu0
        %v2396 = vadd.f32 %v2327, %v2395
        %v2397 = vpop.f32.mrf.mxu0
        %2398 = vmatprep.mubr.f32.mxu0 0.0
        %2399 = vmatmul.mubr.f32.gmra.mxu0 %v613
        %v2400 = vpop.f32.mrf.mxu0
        %v2401 = vadd.f32 %v2327, %v2400
        %v2402 = vpop.f32.mrf.mxu0
        %2403 = vdwg.mxu0
        %v2404 = vmax.f32 %v2396, 0.0
        %v2405 = vmax.f32 %v2401, 0.0
        %v2406 = vld [vmem:[#allocation17] sm:$0xff]
        %v2407 = vld [vmem:[#allocation17 + $0x8] sm:$0xff]
        %v2408 = vld [vmem:[#allocation17 + $0x10] sm:$0xff]
        %v2409 = vld [vmem:[#allocation17 + $0x18] sm:$0xff]
        %v2410 = vld [vmem:[#allocation17 + $0x20] sm:$0xff]
        %v2411 = vld [vmem:[#allocation17 + $0x28] sm:$0xff]
        %v2412 = vld [vmem:[#allocation17 + $0x30] sm:$0xff]
        %v2413 = vld [vmem:[#allocation17 + $0x38] sm:$0xff]
        %v2414 = vld [vmem:[#allocation19] sm:$0x1]
        %v2416 = vlaneseq
        %v2417 = vshrl.u32 %v2416, 7
        %v2418 = vsub.s32 0, %v2417
        %v2419 = vrot.slane %v2414, %v2418
        %2421 = vmatprep.subr.mxu0 0.0
        %2422 = vmatpush1.msra.mxu0 0.0
        %2423 = vmatprep.subr.mxu0 0.0
        %2424 = vmatpush1.msra.mxu0 0.0
        %2425 = vmatprep.subr.mxu0 0.0
        %2426 = vmatpush1.msra.mxu0 0.0
        %2427 = vmatprep.subr.mxu0 0.0
        %2428 = vmatpush1.msra.mxu0 0.0
        %2429 = vmatprep.subr.mxu0 0.0
        %2430 = vmatpush1.msra.mxu0 0.0
        %2431 = vmatprep.subr.mxu0 0.0
        %2432 = vmatpush1.msra.mxu0 0.0
        %2433 = vmatprep.subr.mxu0 0.0
        %2434 = vmatpush1.msra.mxu0 0.0
        %2435 = vmatprep.subr.mxu0 0.0
        %2436 = vmatpush1.msra.mxu0 0.0
        %2437 = vmatprep.subr.mxu0 0.0
        %2438 = vmatpush1.msra.mxu0 %v2413
        %2439 = vmatprep.subr.mxu0 0.0
        %2440 = vmatpush1.msra.mxu0 %v2412
        %2441 = vmatprep.subr.mxu0 0.0
        %2442 = vmatpush1.msra.mxu0 %v2411
        %2443 = vmatprep.subr.mxu0 0.0
        %2444 = vmatpush1.msra.mxu0 %v2410
        %2445 = vmatprep.subr.mxu0 0.0
        %2446 = vmatpush1.msra.mxu0 %v2409
        %2447 = vmatprep.subr.mxu0 0.0
        %2448 = vmatpush1.msra.mxu0 %v2408
        %2449 = vmatprep.subr.mxu0 0.0
        %2450 = vmatpush1.msra.mxu0 %v2407
        %2451 = vmatprep.subr.mxu0 0.0
        %2452 = vmatpush1.msra.mxu0 %v2406
        %2453 = vmatprep.subr.mxu0 0.0
        %2454 = vmatpush2.msra.mxu0 0.0
        %2455 = vmatprep.subr.mxu0 0.0
        %2456 = vmatpush2.msra.mxu0 0.0
        %2457 = vmatprep.subr.mxu0 0.0
        %2458 = vmatpush2.msra.mxu0 0.0
        %2459 = vmatprep.subr.mxu0 0.0
        %2460 = vmatpush2.msra.mxu0 0.0
        %2461 = vmatprep.subr.mxu0 0.0
        %2462 = vmatpush2.msra.mxu0 0.0
        %2463 = vmatprep.subr.mxu0 0.0
        %2464 = vmatpush2.msra.mxu0 0.0
        %2465 = vmatprep.subr.mxu0 0.0
        %2466 = vmatpush2.msra.mxu0 0.0
        %2467 = vmatprep.subr.mxu0 0.0
        %2468 = vmatpush2.msra.mxu0 0.0
        %2469 = vmatprep.subr.mxu0 0.0
        %2470 = vmatpush2.msra.mxu0 0.0
        %2471 = vmatprep.subr.mxu0 0.0
        %2472 = vmatpush2.msra.mxu0 0.0
        %2473 = vmatprep.subr.mxu0 0.0
        %2474 = vmatpush2.msra.mxu0 0.0
        %2475 = vmatprep.subr.mxu0 0.0
        %2476 = vmatpush2.msra.mxu0 0.0
        %2477 = vmatprep.subr.mxu0 0.0
        %2478 = vmatpush2.msra.mxu0 0.0
        %2479 = vmatprep.subr.mxu0 0.0
        %2480 = vmatpush2.msra.mxu0 0.0
        %2481 = vmatprep.subr.mxu0 0.0
        %2482 = vmatpush2.msra.mxu0 0.0
        %2483 = vmatprep.subr.mxu0 0.0
        %2484 = vmatpush2.msra.mxu0 0.0
        %2485 = vmatprep.mubr.f32.mxu0 0.0
        %2486 = vmatmul.mubr.f32.gmra.mxu0 %v610
        %v2487 = vpop.f32.mrf.mxu0
        %v2488 = vadd.f32 %v2419, %v2487
        %v2489 = vpop.f32.mrf.mxu0
        %2490 = vmatprep.mubr.f32.mxu0 0.0
        %2491 = vmatmul.mubr.f32.gmra.mxu0 %v613
        %v2492 = vpop.f32.mrf.mxu0
        %v2493 = vadd.f32 %v2419, %v2492
        %v2494 = vpop.f32.mrf.mxu0
        %2495 = vdwg.mxu0
        %v2496 = vmax.f32 %v2488, 0.0
        %v2497 = vmax.f32 %v2493, 0.0
        %v2498 = vadd.f32 %v1290, %v2404
        %v2499 = vadd.f32 %v1291, %v2405
        %2500 = vst [vmem:[%s570] sm:$0xff] %v2498
        %2501 = vst [vmem:[%s570 + $0x8] sm:$0xff] %v2499
        %v2502 = vadd.f32 %v2312, %v2496
        %v2503 = vadd.f32 %v2313, %v2497
        %2504 = vst [vmem:[%s577] sm:$0xff] %v2502
        %2505 = vst [vmem:[%s577 + $0x8] sm:$0xff] %v2503
        %s2506 = sand.u32 %s282, 1
        %s2507 = scalar_lea.sflag [#allocation4], %s2506
        %s2508 = sand.u32 %s282, 1
        %s2509 = smul.addr %s2508, 16
        %s2510 = scalar_lea.vmem [#allocation20], %s2509
        %s2511 = sand.u32 %s308, 1
        %s2512 = scalar_lea.sflag [#allocation22], %s2511
        %s2513 = sand.u32 %s308, 1
        %s2514 = smul.addr %s2513, 16
        %s2515 = scalar_lea.vmem [#allocation21], %s2514
        // Predicated region
        $region109: #{tpu_custom_call.1} parent=63 // pred_check
          %p2516 = pneg %p292
        $region110: #{tpu_custom_call.1} parent=63 // pred_check_branch
          %2518 = sbr.rel (%p2516) target = $region112
        $region111: #{tpu_custom_call.1} parent=63 // pred_region
          %s2520 = ssub.s32 256, 256
          %2521 = vsyncadd %s2507, %s2520
          %s2522 = smul.addr %s38, 2
          %s2523 = smul.addr %s2522, 128
          %s2524 = scalar_lea.hbm %s11, %s2523
          %s2525 = sshll.u32 %s2510, 4
          %s2526 = int_to_ptr.vmem [resolvable:$true] %s2525
          %2531 = dma.vmem_to_hbm [thread:$0]  %s2526, 256, %s2524, %s2507, 128, 128, 8
        $region112: #{tpu_custom_call.1} parent=63 // pred_fallthru
          _
        // Predicated region
        $region113: #{tpu_custom_call.1} parent=63 // pred_check
          %p2532 = pneg %p318
        $region114: #{tpu_custom_call.1} parent=63 // pred_check_branch
          %2534 = sbr.rel (%p2532) target = $region116
        $region115: #{tpu_custom_call.1} parent=63 // pred_region
          %s2536 = ssub.s32 256, 256
          %2537 = vsyncadd %s2512, %s2536
          %s2538 = smul.addr %s38, 2
          %s2539 = smul.addr %s2538, 128
          %s2540 = scalar_lea.hbm %s12, %s2539
          %s2541 = sshll.u32 %s2515, 4
          %s2542 = int_to_ptr.vmem [resolvable:$true] %s2541
          %2547 = dma.vmem_to_hbm [thread:$0]  %s2542, 256, %s2540, %s2512, 128, 128, 8
        $region116: #{tpu_custom_call.1} parent=63 // pred_fallthru
          _
      $region64: #{tpu_custom_call.1} parent=5 // pred_fallthru
        _
      %p2548 = scmp.le.s32.totalorder 2, %s33
      // Predicated region
      $region117: #{tpu_custom_call.1} parent=5 // pred_check
        %p2549 = pneg %p2548
      $region118: #{tpu_custom_call.1} parent=5 // pred_check_branch
        %2551 = sbr.rel (%p2549) target = $region120
      $region119: #{tpu_custom_call.1} parent=5 // pred_region
        %s2552 = ssub.s32 %s33, 2
        // Predicated region
        $region121: #{tpu_custom_call.1} parent=119 // pred_check
          %p2553 = pneg %p298
        $region122: #{tpu_custom_call.1} parent=119 // pred_check_branch
          %2555 = sbr.rel (%p2553) target = $region124
        $region123: #{tpu_custom_call.1} parent=119 // pred_region
          %s2556 = sand.u32 %s283, 1
          %s2557 = scalar_lea.sflag [#allocation4], %s2556
          %s2558 = sand.u32 %s283, 1
          %s2559 = smul.addr %s2558, 16
          %s2560 = scalar_lea.vmem [#allocation20], %s2559
          %2561 = dma.done %s2557, 256
        $region124: #{tpu_custom_call.1} parent=119 // pred_fallthru
          _
        // Predicated region
        $region125: #{tpu_custom_call.1} parent=119 // pred_check
          %p2562 = pneg %p324
        $region126: #{tpu_custom_call.1} parent=119 // pred_check_branch
          %2564 = sbr.rel (%p2562) target = $region128
        $region127: #{tpu_custom_call.1} parent=119 // pred_region
          %s2565 = sand.u32 %s309, 1
          %s2566 = scalar_lea.sflag [#allocation22], %s2565
          %s2567 = sand.u32 %s309, 1
          %s2568 = smul.addr %s2567, 16
          %s2569 = scalar_lea.vmem [#allocation21], %s2568
          %2570 = dma.done %s2566, 256
        $region128: #{tpu_custom_call.1} parent=119 // pred_fallthru
          _
      $region120: #{tpu_custom_call.1} parent=5 // pred_fallthru
        _
    $region6: #{tpu_custom_call.1} parent=1 // loop_footer
      %s37 = sadd.s32 1, %s33
    $region7: #{tpu_custom_call.1} parent=1 // loop_footer_branch
      %32 = sbr.rel target = $region3
    $region8: #{tpu_custom_call.1} parent=1 // loop_exit
      _
    %2571 = vsyncpa [#allocation3], 1
    %s2572 = scalar_lea.sflag [#allocation3], 1
    %2573 = vsyncpa %s2572, 1
    %2574 = vsyncpa [#allocation6], 1
    %2575 = vsyncpa [#allocation9], 1
    %2576 = vsyncpa [#allocation12], 1
    %2577 = vsyncpa [#allocation15], 1
    %2578 = vsyncpa [#allocation18], 1
    %2579 = vsyncpa [#allocation4], 1
    %s2580 = scalar_lea.sflag [#allocation4], 1
    %2581 = vsyncpa %s2580, 1
    %2582 = vsyncpa [#allocation22], 1
    %s2583 = scalar_lea.sflag [#allocation22], 1
    %2584 = vsyncpa %s2583, 1

</llo_original>
